<compile_context>
chip_gen: v7x
topology: tpu7x:2x2x1
jax: 0.10.0
libtpu: 0.0.40
codegen_flags: <defaults>
</compile_context>

<pallas_src>
import jax
import jax.numpy as jnp
from jax.experimental import pallas as pl
from jax.experimental.pallas import tpu as pltpu


def _round_up(x, m):
    return ((x + m - 1) // m) * m


def fnn_kernel(emb_ref, w1_ref, b1_ref, w2_ref, b2_ref, out_ref,
               hid_ref, m_ref, l_ref):
    # Grid: (batch tile b, pass p, vocab tile v).
    #   emb_ref: (TB, ninp) bf16     w1_ref: (ninp, nhid) bf16   b1_ref: (1, nhid) f32
    #   w2_ref:  (nhid, TN) bf16     b2_ref: (1, TN) f32         out_ref: (TB, TN) f32
    #   hid_ref: (TB, nhid) bf16 scratch (tanh activations, cached per batch tile)
    #   m_ref/l_ref: (TB, 1) f32 scratch (online log-sum-exp state)
    p = pl.program_id(1)
    v = pl.program_id(2)

    # Once per batch tile: hidden activations + init of the online-LSE state.
    @pl.when(jnp.logical_and(p == 0, v == 0))
    def _():
        h = jnp.dot(emb_ref[...], w1_ref[...],
                    preferred_element_type=jnp.float32)
        h = jnp.tanh(h + b1_ref[...])
        hid_ref[...] = h.astype(hid_ref.dtype)
        m_ref[...] = jnp.full_like(m_ref, -jnp.inf)
        l_ref[...] = jnp.zeros_like(l_ref)

    # Logits for the current vocab tile (W2 column block streamed by BlockSpec).
    logits = jnp.dot(hid_ref[...], w2_ref[...],
                     preferred_element_type=jnp.float32) + b2_ref[...]

    # Pass 0: accumulate running max / sum-exp across the vocab tiles.
    @pl.when(p == 0)
    def _():
        m_prev = m_ref[...]
        m_new = jnp.maximum(m_prev, jnp.max(logits, axis=-1, keepdims=True))
        l_ref[...] = (l_ref[...] * jnp.exp(m_prev - m_new)
                      + jnp.sum(jnp.exp(logits - m_new), axis=-1, keepdims=True))
        m_ref[...] = m_new

    # Pass 1: normalize and write the lane-dense (TB, TN) log-prob tile.
    @pl.when(p == 1)
    def _():
        lse = m_ref[...] + jnp.log(l_ref[...])
        out_ref[...] = logits - lse


def fnn_forward(token_ids, emb_table, w1, b1, w2, b2, *, tb=128, tn=None):
    """token_ids: (B,) int32 -> log_probs (B, ntoken) float32."""
    ntoken, ninp = emb_table.shape
    nhid = w1.shape[1]
    assert w2.shape == (nhid, ntoken)
    B = token_ids.shape[0]

    # Vocab tile: multiple of 128 (lane-dense stores); fall back to full vocab.
    if tn is None:
        tn = next((c for c in (2048, 1024, 512, 256, 128) if ntoken % c == 0),
                  ntoken)
    # Batch tile: multiple of 8; pad the batch up to a whole number of tiles.
    tb = min(tb, _round_up(B, 8))
    b_pad = _round_up(B, tb)

    ids = token_ids
    if b_pad != B:
        ids = jnp.concatenate([ids, jnp.zeros((b_pad - B,), dtype=ids.dtype)])

    # Embedding gather (glue).  bf16 activations/weights halve HBM->VMEM traffic;
    # all matmul accumulation stays in f32 inside the kernel.
    # TODO(synk): fuse the gather in-kernel (scalar-prefetch ids + row DMA).
    embeds = jnp.take(emb_table, ids, axis=0).astype(jnp.bfloat16)
    w1_bf = w1.astype(jnp.bfloat16)
    w2_bf = w2.astype(jnp.bfloat16)
    b1_2d = b1.reshape(1, nhid).astype(jnp.float32)
    b2_2d = b2.reshape(1, ntoken).astype(jnp.float32)

    nb = b_pad // tb
    nv = ntoken // tn
    grid = (nb, 2, nv)  # (batch tiles, {stats, write} pass, vocab tiles)

    out = pl.pallas_call(
        fnn_kernel,
        out_shape=jax.ShapeDtypeStruct((b_pad, ntoken), jnp.float32),
        grid_spec=pltpu.PrefetchScalarGridSpec(
            num_scalar_prefetch=0,
            grid=grid,
            in_specs=[
                pl.BlockSpec((tb, ninp), lambda b, p, v: (b, 0)),
                pl.BlockSpec((ninp, nhid), lambda b, p, v: (0, 0)),
                pl.BlockSpec((1, nhid), lambda b, p, v: (0, 0)),
                pl.BlockSpec((nhid, tn), lambda b, p, v: (0, v)),
                pl.BlockSpec((1, tn), lambda b, p, v: (0, v)),
            ],
            # Pass 0 keeps block (b, 0) resident (never flushed mid-pass); pass 1
            # writes each (b, v) block exactly once -> no block revisits.
            out_specs=pl.BlockSpec((tb, tn), lambda b, p, v: (b, v * p)),
            scratch_shapes=[
                pltpu.VMEM((tb, nhid), jnp.bfloat16),  # cached tanh activations
                pltpu.VMEM((tb, 1), jnp.float32),      # running max
                pltpu.VMEM((tb, 1), jnp.float32),      # running sum-exp
            ],
        ),
        compiler_params=pltpu.CompilerParams(
            dimension_semantics=("parallel", "arbitrary", "arbitrary"),
            vmem_limit_bytes=64 * 1024 * 1024,
        ),
        cost_estimate=pl.CostEstimate(
            flops=2 * b_pad * (ninp * nhid + 2 * nhid * ntoken),
            transcendentals=b_pad * (nhid + 2 * ntoken),
            bytes_accessed=(b_pad * ninp * 2 + ninp * nhid * 2
                            + 2 * nhid * ntoken * 2 + nhid * 4 + 2 * ntoken * 4
                            + b_pad * ntoken * 4),
        ),
    )(embeds, w1_bf, b1_2d, w2_bf, b2_2d)

    return out[:B]


if __name__ == "__main__":
    # Small but tiling-friendly shapes consistent with the module (nhid=200 as in
    # the reference code; batch fills the MXU M dimension, vocab spans >1 tile).
    ntoken, ninp, nhid = 1024, 128, 200
    B = 256

    key = jax.random.PRNGKey(0)
    k_emb, k_w1, k_b1, k_w2, k_b2, k_in = jax.random.split(key, 6)

    initrange = 0.1
    # nn.Embedding weight: uniform(-0.1, 0.1)
    emb_table = jax.random.uniform(
        k_emb, (ntoken, ninp), jnp.float32, -initrange, initrange)
    # nn.Linear(ninp, nhid): default PyTorch init, uniform(+-1/sqrt(fan_in))
    bound1 = 1.0 / (ninp ** 0.5)
    w1 = jax.random.uniform(k_w1, (ninp, nhid), jnp.float32, -bound1, bound1)
    b1 = jax.random.uniform(k_b1, (nhid,), jnp.float32, -bound1, bound1)
    # nn.Linear(nhid, ntoken): weight overwritten by uniform(-0.1, 0.1), bias default.
    w2 = jax.random.uniform(k_w2, (nhid, ntoken), jnp.float32, -initrange, initrange)
    bound2 = 1.0 / (nhid ** 0.5)
    b2 = jax.random.uniform(k_b2, (ntoken,), jnp.float32, -bound2, bound2)

    token_ids = jax.random.randint(k_in, (B,), 0, ntoken, dtype=jnp.int32)

    # tn=256 -> 4 vocab tiles, tb=128 -> 2 batch tiles (exercises the full pipeline).
    log_probs = fnn_forward(token_ids, emb_table, w1, b1, w2, b2, tb=128, tn=256)
    jax.block_until_ready(log_probs)

    assert log_probs.shape == (B, ntoken)

    # Rows must normalize in probability space.
    row_sums = jnp.sum(jnp.exp(log_probs), axis=-1)
    assert jnp.allclose(row_sums, jnp.ones((B,)), atol=1e-3)

    # Reference forward (mirrors the kernel's bf16 weight/activation precision).
    x = jnp.take(emb_table, token_ids, axis=0).astype(jnp.bfloat16).astype(jnp.float32)
    h = jnp.tanh(x @ w1.astype(jnp.bfloat16).astype(jnp.float32) + b1)
    h = h.astype(jnp.bfloat16).astype(jnp.float32)
    logits = h @ w2.astype(jnp.bfloat16).astype(jnp.float32) + b2
    ref = jax.nn.log_softmax(logits, axis=-1)
    assert float(jnp.max(jnp.abs(log_probs - ref))) < 5e-2

    print("KERNEL_OK")
</pallas_src>

<mosaic_0001>
module attributes {stable_mosaic.version = 11 : i64} {
  func.func @fnn_kernel(%arg0: i32, %arg1: i32, %arg2: i32, %arg3: memref<128x128xbf16, #tpu.memory_space<vmem>>, %arg4: memref<128x200xbf16, #tpu.memory_space<vmem>>, %arg5: memref<1x200xf32, #tpu.memory_space<vmem>>, %arg6: memref<200x256xbf16, #tpu.memory_space<vmem>>, %arg7: memref<1x256xf32, #tpu.memory_space<vmem>>, %arg8: memref<128x256xf32, #tpu.memory_space<vmem>>, %arg9: memref<128x200xbf16, #tpu.memory_space<vmem>>, %arg10: memref<128x1xf32, #tpu.memory_space<vmem>>, %arg11: memref<128x1xf32, #tpu.memory_space<vmem>>) attributes {dimension_semantics = [#tpu.dimension_semantics<parallel>, #tpu.dimension_semantics<arbitrary>, #tpu.dimension_semantics<arbitrary>], iteration_bounds = array<i64: 2, 2, 4>, scalar_prefetch = 0 : i64, scratch_operands = 3 : i64, tpu.core_type = #tpu.core_type<tc>, window_params = [{transform_indices = @transform_0, window_bounds = array<i64: 128, 128>}, {pipeline_mode = #tpu.pipeline_mode<synchronous>, transform_indices = @transform_1, window_bounds = array<i64: 128, 200>}, {pipeline_mode = #tpu.pipeline_mode<synchronous>, transform_indices = @transform_2, window_bounds = array<i64: 1, 200>}, {transform_indices = @transform_3, window_bounds = array<i64: 200, 256>}, {transform_indices = @transform_4, window_bounds = array<i64: 1, 256>}, {transform_indices = @transform_5, window_bounds = array<i64: 128, 256>}]} {
    %c0_i32 = arith.constant 0 : i32
    %0 = arith.cmpi eq, %arg1, %c0_i32 : i32
    %c0_i32_0 = arith.constant 0 : i32
    %1 = arith.cmpi eq, %arg2, %c0_i32_0 : i32
    %2 = arith.andi %0, %1 : i1
    %3 = arith.extui %2 : i1 to i32
    %c0_i32_1 = arith.constant 0 : i32
    %4 = arith.cmpi ne, %3, %c0_i32_1 : i32
    scf.if %4 {
      %c0_10 = arith.constant 0 : index
      %c0_11 = arith.constant 0 : index
      %17 = vector.load %arg3[%c0_10, %c0_11] : memref<128x128xbf16, #tpu.memory_space<vmem>>, vector<128x128xbf16>
      %c0_12 = arith.constant 0 : index
      %c0_13 = arith.constant 0 : index
      %18 = vector.load %arg4[%c0_12, %c0_13] : memref<128x200xbf16, #tpu.memory_space<vmem>>, vector<128x200xbf16>
      %cst_14 = arith.constant dense<0.000000e+00> : vector<128x200xf32>
      %19 = tpu.matmul %17, %18, %cst_14 {dimension_numbers = #tpu.dot_dimension_numbers<[1], [0], [0], [1], [0, 0, 1, 1], [], []>} : vector<128x128xbf16>, vector<128x200xbf16>, vector<128x200xf32> -> vector<128x200xf32>
      %c0_15 = arith.constant 0 : index
      %c0_16 = arith.constant 0 : index
      %20 = vector.load %arg5[%c0_15, %c0_16] : memref<1x200xf32, #tpu.memory_space<vmem>>, vector<1x200xf32>
      %21 = vector.broadcast %20 : vector<1x200xf32> to vector<128x200xf32>
      %22 = arith.addf %19, %21 : vector<128x200xf32>
      %23 = math.tanh %22 : vector<128x200xf32>
      %24 = arith.truncf %23 : vector<128x200xf32> to vector<128x200xbf16>
      %c0_17 = arith.constant 0 : index
      %c0_18 = arith.constant 0 : index
      %25 = vector.load %arg9[%c0_17, %c0_18] : memref<128x200xbf16, #tpu.memory_space<vmem>>, vector<128x200xbf16>
      tpu.vector_store %arg9[%c0_17, %c0_18], %24 {strides = array<i32>} : memref<128x200xbf16, #tpu.memory_space<vmem>>, vector<128x200xbf16>,
      %cst_19 = arith.constant 0xFF800000 : f32
      %26 = vector.broadcast %cst_19 : f32 to vector<128x1xf32>
      %c0_20 = arith.constant 0 : index
      %c0_21 = arith.constant 0 : index
      %27 = vector.load %arg10[%c0_20, %c0_21] : memref<128x1xf32, #tpu.memory_space<vmem>>, vector<128x1xf32>
      tpu.vector_store %arg10[%c0_20, %c0_21], %26 {strides = array<i32>} : memref<128x1xf32, #tpu.memory_space<vmem>>, vector<128x1xf32>,
      %cst_22 = arith.constant 0.000000e+00 : f32
      %28 = vector.broadcast %cst_22 : f32 to vector<128x1xf32>
      %c0_23 = arith.constant 0 : index
      %c0_24 = arith.constant 0 : index
      %29 = vector.load %arg11[%c0_23, %c0_24] : memref<128x1xf32, #tpu.memory_space<vmem>>, vector<128x1xf32>
      tpu.vector_store %arg11[%c0_23, %c0_24], %28 {strides = array<i32>} : memref<128x1xf32, #tpu.memory_space<vmem>>, vector<128x1xf32>,
    } else {
    }
    %c0 = arith.constant 0 : index
    %c0_2 = arith.constant 0 : index
    %5 = vector.load %arg9[%c0, %c0_2] : memref<128x200xbf16, #tpu.memory_space<vmem>>, vector<128x200xbf16>
    %c0_3 = arith.constant 0 : index
    %c0_4 = arith.constant 0 : index
    %6 = vector.load %arg6[%c0_3, %c0_4] : memref<200x256xbf16, #tpu.memory_space<vmem>>, vector<200x256xbf16>
    %cst = arith.constant dense<0.000000e+00> : vector<128x256xf32>
    %7 = tpu.matmul %5, %6, %cst {dimension_numbers = #tpu.dot_dimension_numbers<[1], [0], [0], [1], [0, 0, 1, 1], [], []>} : vector<128x200xbf16>, vector<200x256xbf16>, vector<128x256xf32> -> vector<128x256xf32>
    %c0_5 = arith.constant 0 : index
    %c0_6 = arith.constant 0 : index
    %8 = vector.load %arg7[%c0_5, %c0_6] : memref<1x256xf32, #tpu.memory_space<vmem>>, vector<1x256xf32>
    %9 = vector.broadcast %8 : vector<1x256xf32> to vector<128x256xf32>
    %10 = arith.addf %7, %9 : vector<128x256xf32>
    %c0_i32_7 = arith.constant 0 : i32
    %11 = arith.cmpi eq, %arg1, %c0_i32_7 : i32
    %12 = arith.extui %11 : i1 to i32
    %c0_i32_8 = arith.constant 0 : i32
    %13 = arith.cmpi ne, %12, %c0_i32_8 : i32
    scf.if %13 {
      %c0_10 = arith.constant 0 : index
      %c0_11 = arith.constant 0 : index
      %17 = vector.load %arg10[%c0_10, %c0_11] : memref<128x1xf32, #tpu.memory_space<vmem>>, vector<128x1xf32>
      %cst_12 = arith.constant dense<0xFF800000> : vector<128xf32>
      %18 = vector.multi_reduction <maximumf>, %10, %cst_12 [1] : vector<128x256xf32> to vector<128xf32>
      %19 = vector.shape_cast %18 : vector<128xf32> to vector<128x1xf32>
      %20 = arith.maximumf %17, %19 : vector<128x1xf32>
      %c0_13 = arith.constant 0 : index
      %c0_14 = arith.constant 0 : index
      %21 = vector.load %arg11[%c0_13, %c0_14] : memref<128x1xf32, #tpu.memory_space<vmem>>, vector<128x1xf32>
      %22 = arith.subf %17, %20 : vector<128x1xf32>
      %23 = math.exp %22 : vector<128x1xf32>
      %24 = arith.mulf %21, %23 : vector<128x1xf32>
      %25 = vector.broadcast %20 : vector<128x1xf32> to vector<128x256xf32>
      %26 = arith.subf %10, %25 : vector<128x256xf32>
      %27 = math.exp %26 : vector<128x256xf32>
      %cst_15 = arith.constant dense<0.000000e+00> : vector<128xf32>
      %28 = vector.multi_reduction <add>, %27, %cst_15 [1] : vector<128x256xf32> to vector<128xf32>
      %29 = vector.shape_cast %28 : vector<128xf32> to vector<128x1xf32>
      %30 = arith.addf %24, %29 : vector<128x1xf32>
      %c0_16 = arith.constant 0 : index
      %c0_17 = arith.constant 0 : index
      %31 = vector.load %arg11[%c0_16, %c0_17] : memref<128x1xf32, #tpu.memory_space<vmem>>, vector<128x1xf32>
      tpu.vector_store %arg11[%c0_16, %c0_17], %30 {strides = array<i32>} : memref<128x1xf32, #tpu.memory_space<vmem>>, vector<128x1xf32>,
      %c0_18 = arith.constant 0 : index
      %c0_19 = arith.constant 0 : index
      %32 = vector.load %arg10[%c0_18, %c0_19] : memref<128x1xf32, #tpu.memory_space<vmem>>, vector<128x1xf32>
      tpu.vector_store %arg10[%c0_18, %c0_19], %20 {strides = array<i32>} : memref<128x1xf32, #tpu.memory_space<vmem>>, vector<128x1xf32>,
    } else {
    }
    %c1_i32 = arith.constant 1 : i32
    %14 = arith.cmpi eq, %arg1, %c1_i32 : i32
    %15 = arith.extui %14 : i1 to i32
    %c0_i32_9 = arith.constant 0 : i32
    %16 = arith.cmpi ne, %15, %c0_i32_9 : i32
    scf.if %16 {
      %c0_10 = arith.constant 0 : index
      %c0_11 = arith.constant 0 : index
      %17 = vector.load %arg10[%c0_10, %c0_11] : memref<128x1xf32, #tpu.memory_space<vmem>>, vector<128x1xf32>
      %c0_12 = arith.constant 0 : index
      %c0_13 = arith.constant 0 : index
      %18 = vector.load %arg11[%c0_12, %c0_13] : memref<128x1xf32, #tpu.memory_space<vmem>>, vector<128x1xf32>
      %19 = math.log %18 : vector<128x1xf32>
      %20 = arith.addf %17, %19 : vector<128x1xf32>
      %21 = vector.broadcast %20 : vector<128x1xf32> to vector<128x256xf32>
      %22 = arith.subf %10, %21 : vector<128x256xf32>
      %c0_14 = arith.constant 0 : index
      %c0_15 = arith.constant 0 : index
      %23 = vector.load %arg8[%c0_14, %c0_15] : memref<128x256xf32, #tpu.memory_space<vmem>>, vector<128x256xf32>
      tpu.vector_store %arg8[%c0_14, %c0_15], %22 {strides = array<i32>} : memref<128x256xf32, #tpu.memory_space<vmem>>, vector<128x256xf32>,
    } else {
    }
    return
  }
  func.func @transform_0(%arg0: i32, %arg1: i32, %arg2: i32) -> (i32, i32) {
    %c0_i32 = arith.constant 0 : i32
    %c0_i32_0 = arith.constant 0 : i32
    return %arg0, %c0_i32 : i32, i32
  }
  func.func @transform_1(%arg0: i32, %arg1: i32, %arg2: i32) -> (i32, i32) {
    %c0_i32 = arith.constant 0 : i32
    %c0_i32_0 = arith.constant 0 : i32
    %c0_i32_1 = arith.constant 0 : i32
    return %c0_i32, %c0_i32_0 : i32, i32
  }
  func.func @transform_2(%arg0: i32, %arg1: i32, %arg2: i32) -> (i32, i32) {
    %c0_i32 = arith.constant 0 : i32
    %c0_i32_0 = arith.constant 0 : i32
    %c0_i32_1 = arith.constant 0 : i32
    return %c0_i32, %c0_i32_0 : i32, i32
  }
  func.func @transform_3(%arg0: i32, %arg1: i32, %arg2: i32) -> (i32, i32) {
    %c0_i32 = arith.constant 0 : i32
    %c0_i32_0 = arith.constant 0 : i32
    return %c0_i32, %arg2 : i32, i32
  }
  func.func @transform_4(%arg0: i32, %arg1: i32, %arg2: i32) -> (i32, i32) {
    %c0_i32 = arith.constant 0 : i32
    %c0_i32_0 = arith.constant 0 : i32
    return %c0_i32, %arg2 : i32, i32
  }
  func.func @transform_5(%arg0: i32, %arg1: i32, %arg2: i32) -> (i32, i32) {
    %0 = arith.muli %arg2, %arg1 : i32
    %c0_i32 = arith.constant 0 : i32
    return %arg0, %0 : i32, i32
  }
}

</mosaic_0001>

<llo_original>
// kernel: tpu_custom_call.1
$region0: #{tpu_custom_call.1}
  #allocation0 [shape = 'u32[]', space=smem, size = 0x4, offset = 0x4, fixed_abs, tag = 'smem constant byte address 0x4 - core index']
  #allocation1 [shape = 'u32[144,128]{1,0:T(1,128)}', space=vmem, size = 0x12000, scoped, tag = 'internal scratch']
  #allocation2 [shape = 'bf16[128,200]{1,0:T(16,128)(2,1)}', space=vmem, size = 0x10000, scoped, tag = 'scratch operand']
  #allocation3 [shape = 'f32[128,1]{1,0:T(8,128)}', space=vmem, size = 0x10000, scoped, tag = 'scratch operand']
  #allocation4 [shape = 'f32[128,1]{1,0:T(8,128)}', space=vmem, size = 0x10000, scoped, tag = 'scratch operand']
  %s0 = inlined_call_operand.hbm [shape: bf16[256,128], index: 0, kind: input, shape index: {}]
  %s1 = inlined_call_operand.hbm [shape: bf16[128,200], index: 1, kind: input, shape index: {}]
  %s2 = inlined_call_operand.hbm [shape: f32[1,200], index: 2, kind: input, shape index: {}]
  %s3 = inlined_call_operand.hbm [shape: bf16[200,1024], index: 3, kind: input, shape index: {}]
  %s4 = inlined_call_operand.hbm [shape: f32[1,1024], index: 4, kind: input, shape index: {}]
  %s5 = inlined_call_operand.hbm [shape: f32[256,1024], index: 5, kind: output, shape index: {}]
  %s6 = sld [smem:[#allocation0]]
  $region85: #{tpu_custom_call.1} parent=0
    _
  %s8 = ssub.s32 1, %s6
  %s9 = scalar_select 0, %s8, %s6
  $region1: #{tpu_custom_call.1} parent=0
    #allocation5 [shape = 'u8[65536]{0}', space=vmem, size = 0x10000, scoped, tag = 'input window, operand 0']
    #allocation6 [shape = 's32[2]{0}', space=sflag, size = 0x8, scoped, tag = 'scoped memory for tpu_custom_call.1']
    #allocation7 [shape = 's32[2]{0}', space=sflag, size = 0x8, scoped, tag = 'scoped memory for tpu_custom_call.1']
    #allocation8 [shape = 'u8[65536]{0}', space=vmem, size = 0x10000, scoped, tag = 'input window, operand 1, single buffered']
    #allocation9 [shape = 's32[1]{0}', space=sflag, size = 0x4, scoped, tag = 'scoped memory for tpu_custom_call.1']
    #allocation10 [shape = 'u8[1024]{0}', space=vmem, size = 0x400, scoped, tag = 'input window, operand 2, single buffered']
    #allocation11 [shape = 'u8[204800]{0}', space=vmem, size = 0x32000, scoped, tag = 'input window, operand 3']
    #allocation12 [shape = 's32[2]{0}', space=sflag, size = 0x8, scoped, tag = 'scoped memory for tpu_custom_call.1']
    #allocation13 [shape = 'u8[2048]{0}', space=vmem, size = 0x800, scoped, tag = 'input window, operand 4']
    #allocation14 [shape = 'u8[262144]{0}', space=vmem, size = 0x40000, scoped, tag = 'output window, operand 0']
    %10 = vsyncpa [#allocation6], 0
    %s11 = scalar_lea.sflag [#allocation6], 1
    %12 = vsyncpa %s11, 0
    %13 = vsyncpa [#allocation9], 0
    %14 = vsyncpa [#allocation12], 0
    %s15 = scalar_lea.sflag [#allocation12], 1
    %16 = vsyncpa %s15, 0
    %17 = vsyncpa [#allocation7], 0
    %s18 = scalar_lea.sflag [#allocation7], 1
    %19 = vsyncpa %s18, 0
    loop: start=0, step=1, limit=18
    $region2: #{tpu_custom_call.1} parent=1 // loop_pre_header
      _
    $region3: #{tpu_custom_call.1} parent=1 // loop_header
      %s21 = sphi 0, %s25
      %p22 = scmp.ge.s32.totalorder %s21, 18
      %s28 = sphi 0, %s47
      %s29 = sphi 0, %s43
      %s30 = sphi 0, %s39
      %s31 = sphi 0, %s28
      %s32 = sphi 0, %s29
      %s33 = sphi 0, %s30
      %s34 = sphi 0, %s31
      %s35 = sphi 0, %s32
      %s36 = sphi 0, %s33
      %s50 = sphi 0, %s52
      %s53 = sphi 0, %s50
      %s54 = sphi 0, %s53
      %s70 = sphi 0, %s54
      %s74 = sphi 0, %s74
      %s76 = sphi 0, %s74
      %s77 = sphi 0, %s76
      %s91 = sphi 0, %s77
      %s95 = sphi 0, %s95
      %s97 = sphi 0, %s95
      %s98 = sphi 0, %s97
      %s112 = sphi 0, %s98
      %s118 = sphi 0, %s120
      %s121 = sphi 0, %s118
      %s122 = sphi 0, %s121
      %s138 = sphi 0, %s122
      %s144 = sphi 0, %s146
      %s147 = sphi 0, %s144
      %s148 = sphi 0, %s147
      %s164 = sphi 0, %s148
      %s174 = sphi 0, %s176
      %s177 = sphi 0, %s174
      %s178 = sphi 0, %s177
      %s194 = sphi 0, %s178
    $region4: #{tpu_custom_call.1} parent=1 // loop_header_branch
      %24 = sbr.rel (%p22) target = $region8
    $region5: #{tpu_custom_call.1} parent=1 // loop_body
      %s26 = ssub.s32 %s21, 1
      %s27 = ssub.s32 %s21, 2
      %s37 = sadd.s32 1, %s30
      %p38 = scmp.ge.s32.totalorder %s37, 4
      %s39 = scalar_select %p38, 0, %s37
      %s40 = sadd.s32 1, %s29
      %s41 = scalar_select %p38, %s40, %s29
      %p42 = scmp.ge.s32.totalorder %s41, 2
      %s43 = scalar_select %p42, 0, %s41
      %s44 = sadd.s32 1, %s28
      %s45 = scalar_select %p42, %s44, %s28
      %p46 = scmp.ge.s32.totalorder %s45, 2
      %s47 = scalar_select %p46, 0, %s45
      %s48 = ssub.s32 %s28, %s47
      %p49 = scmp.eq.s32.totalorder %s48, 0
      %s51 = sadd.s32 %s50, 1
      %s52 = scalar_select %p49, %s50, %s51
      %p55 = pneg %p49
      %p56 = scmp.eq.s32.totalorder %s21, 15
      %p57 = por %p55, %p56
      %p58 = scmp.ne.s32.totalorder %s50, %s53
      %p59 = scmp.eq.s32.totalorder %s21, 0
      %p60 = por %p58, %p59
      %p61 = scmp.ne.s32.totalorder %s50, %s53
      %p62 = scmp.eq.s32.totalorder %s26, 15
      %p63 = por %p61, %p62
      %p64 = scmp.ne.s32.totalorder %s53, %s54
      %p65 = scmp.eq.s32.totalorder %s26, 0
      %p66 = por %p64, %p65
      %p67 = scmp.ne.s32.totalorder %s53, %s54
      %p68 = scmp.eq.s32.totalorder %s27, 15
      %p69 = por %p67, %p68
      %p71 = scmp.ne.s32.totalorder %s54, %s70
      %p72 = scmp.eq.s32.totalorder %s27, 0
      %p73 = por %p71, %p72
      %s75 = sadd.s32 %s74, 1
      %p78 = scmp.eq.s32.totalorder %s21, 15
      %p79 = scmp.ne.s32.totalorder %s74, %s76
      %p80 = scmp.eq.s32.totalorder %s21, 0
      %p81 = por %p79, %p80
      %p82 = scmp.ne.s32.totalorder %s74, %s76
      %p83 = scmp.eq.s32.totalorder %s26, 15
      %p84 = por %p82, %p83
      %p85 = scmp.ne.s32.totalorder %s76, %s77
      %p86 = scmp.eq.s32.totalorder %s26, 0
      %p87 = por %p85, %p86
      %p88 = scmp.ne.s32.totalorder %s76, %s77
      %p89 = scmp.eq.s32.totalorder %s27, 15
      %p90 = por %p88, %p89
      %p92 = scmp.ne.s32.totalorder %s77, %s91
      %p93 = scmp.eq.s32.totalorder %s27, 0
      %p94 = por %p92, %p93
      %s96 = sadd.s32 %s95, 1
      %p99 = scmp.eq.s32.totalorder %s21, 15
      %p100 = scmp.ne.s32.totalorder %s95, %s97
      %p101 = scmp.eq.s32.totalorder %s21, 0
      %p102 = por %p100, %p101
      %p103 = scmp.ne.s32.totalorder %s95, %s97
      %p104 = scmp.eq.s32.totalorder %s26, 15
      %p105 = por %p103, %p104
      %p106 = scmp.ne.s32.totalorder %s97, %s98
      %p107 = scmp.eq.s32.totalorder %s26, 0
      %p108 = por %p106, %p107
      %p109 = scmp.ne.s32.totalorder %s97, %s98
      %p110 = scmp.eq.s32.totalorder %s27, 15
      %p111 = por %p109, %p110
      %p113 = scmp.ne.s32.totalorder %s98, %s112
      %p114 = scmp.eq.s32.totalorder %s27, 0
      %p115 = por %p113, %p114
      %s116 = ssub.s32 %s30, %s39
      %p117 = scmp.eq.s32.totalorder %s116, 0
      %s119 = sadd.s32 %s118, 1
      %s120 = scalar_select %p117, %s118, %s119
      %p123 = pneg %p117
      %p124 = scmp.eq.s32.totalorder %s21, 15
      %p125 = por %p123, %p124
      %p126 = scmp.ne.s32.totalorder %s118, %s121
      %p127 = scmp.eq.s32.totalorder %s21, 0
      %p128 = por %p126, %p127
      %p129 = scmp.ne.s32.totalorder %s118, %s121
      %p130 = scmp.eq.s32.totalorder %s26, 15
      %p131 = por %p129, %p130
      %p132 = scmp.ne.s32.totalorder %s121, %s122
      %p133 = scmp.eq.s32.totalorder %s26, 0
      %p134 = por %p132, %p133
      %p135 = scmp.ne.s32.totalorder %s121, %s122
      %p136 = scmp.eq.s32.totalorder %s27, 15
      %p137 = por %p135, %p136
      %p139 = scmp.ne.s32.totalorder %s122, %s138
      %p140 = scmp.eq.s32.totalorder %s27, 0
      %p141 = por %p139, %p140
      %s142 = ssub.s32 %s30, %s39
      %p143 = scmp.eq.s32.totalorder %s142, 0
      %s145 = sadd.s32 %s144, 1
      %s146 = scalar_select %p143, %s144, %s145
      %p149 = pneg %p143
      %p150 = scmp.eq.s32.totalorder %s21, 15
      %p151 = por %p149, %p150
      %p152 = scmp.ne.s32.totalorder %s144, %s147
      %p153 = scmp.eq.s32.totalorder %s21, 0
      %p154 = por %p152, %p153
      %p155 = scmp.ne.s32.totalorder %s144, %s147
      %p156 = scmp.eq.s32.totalorder %s26, 15
      %p157 = por %p155, %p156
      %p158 = scmp.ne.s32.totalorder %s147, %s148
      %p159 = scmp.eq.s32.totalorder %s26, 0
      %p160 = por %p158, %p159
      %p161 = scmp.ne.s32.totalorder %s147, %s148
      %p162 = scmp.eq.s32.totalorder %s27, 15
      %p163 = por %p161, %p162
      %p165 = scmp.ne.s32.totalorder %s148, %s164
      %p166 = scmp.eq.s32.totalorder %s27, 0
      %p167 = por %p165, %p166
      %s168 = smul.u32 %s30, %s29
      %s169 = smul.u32 %s39, %s43
      %s170 = ssub.s32 %s28, %s47
      %s171 = ssub.s32 %s168, %s169
      %s172 = sor.u32 %s170, %s171
      %p173 = scmp.eq.s32.totalorder %s172, 0
      %s175 = sadd.s32 %s174, 1
      %s176 = scalar_select %p173, %s174, %s175
      %p179 = pneg %p173
      %p180 = scmp.eq.s32.totalorder %s21, 15
      %p181 = por %p179, %p180
      %p182 = scmp.ne.s32.totalorder %s174, %s177
      %p183 = scmp.eq.s32.totalorder %s21, 0
      %p184 = por %p182, %p183
      %p185 = scmp.ne.s32.totalorder %s174, %s177
      %p186 = scmp.eq.s32.totalorder %s26, 15
      %p187 = por %p185, %p186
      %p188 = scmp.ne.s32.totalorder %s177, %s178
      %p189 = scmp.eq.s32.totalorder %s26, 0
      %p190 = por %p188, %p189
      %p191 = scmp.ne.s32.totalorder %s177, %s178
      %p192 = scmp.eq.s32.totalorder %s27, 15
      %p193 = por %p191, %p192
      %p195 = scmp.ne.s32.totalorder %s178, %s194
      %p196 = scmp.eq.s32.totalorder %s27, 0
      %p197 = por %p195, %p196
      %p198 = scmp.le.s32.totalorder 1, %s21
      %p199 = scmp.lt.s32.totalorder %s21, 17
      %p200 = pnand %p198, %p199
      %p201 = pneg %p200
      // Predicated region
      $region9: #{tpu_custom_call.1} parent=5 // pred_check
        _
      $region10: #{tpu_custom_call.1} parent=5 // pred_check_branch
        %203 = sbr.rel (%p200) target = $region12
      $region11: #{tpu_custom_call.1} parent=5 // pred_region
        %s204 = ssub.s32 %s21, 1
        // Predicated region
        $region13: #{tpu_custom_call.1} parent=11 // pred_check
          %p205 = pneg %p87
        $region14: #{tpu_custom_call.1} parent=11 // pred_check_branch
          %207 = sbr.rel (%p205) target = $region16
        $region15: #{tpu_custom_call.1} parent=11 // pred_region
          %s209 = ssub.s32 2048, 2048
          %210 = vsyncadd [#allocation9], %s209
          %s211 = sshll.u32 [#allocation8], 4
          %s212 = int_to_ptr.vmem [resolvable:$true] %s211
          %217 = dma.hbm_to_vmem [thread:$0]  %s1, 2048, %s212, [#allocation9], 128, 128, 8
        $region16: #{tpu_custom_call.1} parent=11 // pred_fallthru
          _
        // Predicated region
        $region17: #{tpu_custom_call.1} parent=11 // pred_check
          %p218 = pneg %p108
        $region18: #{tpu_custom_call.1} parent=11 // pred_check_branch
          %220 = sbr.rel (%p218) target = $region20
        $region19: #{tpu_custom_call.1} parent=11 // pred_region
          %s222 = ssub.s32 32, 32
          %223 = vsyncadd [#allocation9], %s222
          %s225 = sshll.u32 [#allocation10], 4
          %s226 = int_to_ptr.vmem [resolvable:$true] %s225
          %228 = dma.hbm_to_vmem [thread:$0]  %s2, 32, %s226, [#allocation9]
        $region20: #{tpu_custom_call.1} parent=11 // pred_fallthru
          _
      $region12: #{tpu_custom_call.1} parent=5 // pred_fallthru
        _
      %p229 = scmp.lt.s32.totalorder %s21, 16
      // Predicated region
      $region21: #{tpu_custom_call.1} parent=5 // pred_check
        %p230 = pneg %p229
      $region22: #{tpu_custom_call.1} parent=5 // pred_check_branch
        %232 = sbr.rel (%p230) target = $region24
      $region23: #{tpu_custom_call.1} parent=5 // pred_region
        // Predicated region
        $region25: #{tpu_custom_call.1} parent=23 // pred_check
          %p233 = pneg %p60
        $region26: #{tpu_custom_call.1} parent=23 // pred_check_branch
          %235 = sbr.rel (%p233) target = $region28
        $region27: #{tpu_custom_call.1} parent=23 // pred_region
          %s236 = sand.u32 %s50, 1
          %s237 = scalar_lea.sflag [#allocation6], %s236
          %s238 = sand.u32 %s50, 1
          %s239 = smul.addr %s238, 64
          %s240 = scalar_lea.vmem [#allocation5], %s239
          %s241 = smul.u32 16, %s28
          %s243 = ssub.s32 1024, 1024
          %244 = vsyncadd %s237, %s243
          %s245 = smul.addr %s241, 64
          %s246 = scalar_lea.hbm %s0, %s245
          %s247 = sshll.u32 %s240, 4
          %s248 = int_to_ptr.vmem [resolvable:$true] %s247
          %253 = dma.hbm_to_vmem [thread:$0]  %s246, 1024, %s248, %s237, 64, 64, 4
        $region28: #{tpu_custom_call.1} parent=23 // pred_fallthru
          _
        // Predicated region
        $region29: #{tpu_custom_call.1} parent=23 // pred_check
          %p254 = pneg %p128
        $region30: #{tpu_custom_call.1} parent=23 // pred_check_branch
          %256 = sbr.rel (%p254) target = $region32
        $region31: #{tpu_custom_call.1} parent=23 // pred_region
          %s257 = sand.u32 %s21, 1
          %s258 = scalar_lea.sflag [#allocation12], %s257
          %s259 = sand.u32 %s118, 1
          %s260 = smul.addr %s259, 200
          %s261 = scalar_lea.vmem [#allocation11], %s260
          %s262 = smul.u32 2, %s30
          %s264 = ssub.s32 3200, 3200
          %265 = vsyncadd %s258, %s264
          %s266 = smul.addr %s262, 64
          %s267 = scalar_lea.hbm %s3, %s266
          %s268 = sshll.u32 %s261, 4
          %s269 = int_to_ptr.vmem [resolvable:$true] %s268
          %274 = dma.hbm_to_vmem [thread:$0]  %s267, 3200, %s269, %s258, 512, 128, 8
        $region32: #{tpu_custom_call.1} parent=23 // pred_fallthru
          _
        // Predicated region
        $region33: #{tpu_custom_call.1} parent=23 // pred_check
          %p275 = pneg %p154
        $region34: #{tpu_custom_call.1} parent=23 // pred_check_branch
          %277 = sbr.rel (%p275) target = $region36
        $region35: #{tpu_custom_call.1} parent=23 // pred_region
          %s278 = sand.u32 %s21, 1
          %s279 = scalar_lea.sflag [#allocation12], %s278
          %s280 = sand.u32 %s144, 1
          %s281 = smul.addr %s280, 2
          %s282 = scalar_lea.vmem [#allocation13], %s281
          %s283 = smul.u32 2, %s30
          %s285 = ssub.s32 32, 32
          %286 = vsyncadd %s279, %s285
          %s287 = smul.addr %s283, 16
          %s288 = scalar_lea.hbm %s4, %s287
          %s290 = sshll.u32 %s282, 4
          %s291 = int_to_ptr.vmem [resolvable:$true] %s290
          %293 = dma.hbm_to_vmem [thread:$0]  %s288, 32, %s291, %s279
        $region36: #{tpu_custom_call.1} parent=23 // pred_fallthru
          _
      $region24: #{tpu_custom_call.1} parent=5 // pred_fallthru
        _
      %p294 = scmp.le.s32.totalorder 1, %s21
      %p295 = scmp.lt.s32.totalorder %s21, 17
      %p296 = pnand %p294, %p295
      %p297 = pneg %p296
      // Predicated region
      $region37: #{tpu_custom_call.1} parent=5 // pred_check
        _
      $region38: #{tpu_custom_call.1} parent=5 // pred_check_branch
        %299 = sbr.rel (%p296) target = $region40
      $region39: #{tpu_custom_call.1} parent=5 // pred_region
        %s300 = ssub.s32 %s21, 1
        %s301 = sand.u32 %s53, 1
        %s302 = scalar_lea.sflag [#allocation6], %s301
        %s303 = sand.u32 %s53, 1
        %s304 = smul.addr %s303, 64
        %s305 = scalar_lea.vmem [#allocation5], %s304
        // Predicated region
        $region41: #{tpu_custom_call.1} parent=39 // pred_check
          %p306 = pneg %p66
        $region42: #{tpu_custom_call.1} parent=39 // pred_check_branch
          %308 = sbr.rel (%p306) target = $region44
        $region43: #{tpu_custom_call.1} parent=39 // pred_region
          %309 = dma.done %s302, 1024
        $region44: #{tpu_custom_call.1} parent=39 // pred_fallthru
          _
        // Predicated region
        $region45: #{tpu_custom_call.1} parent=39 // pred_check
          %p310 = pneg %p87
        $region46: #{tpu_custom_call.1} parent=39 // pred_check_branch
          %312 = sbr.rel (%p310) target = $region48
        $region47: #{tpu_custom_call.1} parent=39 // pred_region
          %313 = dma.done [#allocation9], 2048
        $region48: #{tpu_custom_call.1} parent=39 // pred_fallthru
          _
        // Predicated region
        $region49: #{tpu_custom_call.1} parent=39 // pred_check
          %p314 = pneg %p108
        $region50: #{tpu_custom_call.1} parent=39 // pred_check_branch
          %316 = sbr.rel (%p314) target = $region52
        $region51: #{tpu_custom_call.1} parent=39 // pred_region
          %317 = dma.done [#allocation9], 32
        $region52: #{tpu_custom_call.1} parent=39 // pred_fallthru
          _
        %s318 = sand.u32 %s26, 1
        %s319 = scalar_lea.sflag [#allocation12], %s318
        %s320 = sand.u32 %s121, 1
        %s321 = smul.addr %s320, 200
        %s322 = scalar_lea.vmem [#allocation11], %s321
        // Predicated region
        $region53: #{tpu_custom_call.1} parent=39 // pred_check
          %p323 = pneg %p134
        $region54: #{tpu_custom_call.1} parent=39 // pred_check_branch
          %325 = sbr.rel (%p323) target = $region56
        $region55: #{tpu_custom_call.1} parent=39 // pred_region
          %326 = dma.done %s319, 3200
        $region56: #{tpu_custom_call.1} parent=39 // pred_fallthru
          _
        %s327 = sand.u32 %s26, 1
        %s328 = scalar_lea.sflag [#allocation12], %s327
        %s329 = sand.u32 %s147, 1
        %s330 = smul.addr %s329, 2
        %s331 = scalar_lea.vmem [#allocation13], %s330
        // Predicated region
        $region57: #{tpu_custom_call.1} parent=39 // pred_check
          %p332 = pneg %p160
        $region58: #{tpu_custom_call.1} parent=39 // pred_check_branch
          %334 = sbr.rel (%p332) target = $region60
        $region59: #{tpu_custom_call.1} parent=39 // pred_region
          %335 = dma.done %s328, 32
        $region60: #{tpu_custom_call.1} parent=39 // pred_fallthru
          _
        %s336 = sand.u32 %s53, 1
        %s337 = scalar_lea.sflag [#allocation6], %s336
        %s338 = sand.u32 %s53, 1
        %s339 = smul.addr %s338, 64
        %s340 = scalar_lea.vmem [#allocation5], %s339
        %p341 = pneg %p66
        %p342 = pneg %p63
        %p343 = pneg %p87
        %p344 = pneg %p84
        %p345 = pneg %p108
        %p346 = pneg %p105
        %s347 = sand.u32 %s26, 1
        %s348 = scalar_lea.sflag [#allocation12], %s347
        %s349 = sand.u32 %s121, 1
        %s350 = smul.addr %s349, 200
        %s351 = scalar_lea.vmem [#allocation11], %s350
        %p352 = pneg %p134
        %p353 = pneg %p131
        %s354 = sand.u32 %s26, 1
        %s355 = scalar_lea.sflag [#allocation12], %s354
        %s356 = sand.u32 %s147, 1
        %s357 = smul.addr %s356, 2
        %s358 = scalar_lea.vmem [#allocation13], %s357
        %p359 = pneg %p160
        %p360 = pneg %p157
        %p361 = pneg %p190
        %p362 = pneg %p187
        %s363 = sand.u32 %s177, 1
        %s364 = scalar_lea.sflag [#allocation7], %s363
        %s365 = sand.u32 %s177, 1
        %s366 = smul.addr %s365, 256
        %s367 = scalar_lea.vmem [#allocation14], %s366
        %s368 = smul.u32 16, %s31
        %s369 = smul.u32 2, %s33
        %s370 = smul.u32 2, %s33
        %s371 = smul.u32 %s33, %s32
        %s372 = smul.u32 16, %s31
        %s373 = smul.u32 2, %s371
        %p375 = scmp.eq.s32.totalorder %s32, 0
        %p376 = scmp.eq.s32.totalorder %s33, 0
        %p377 = pnand %p375, %p376
        %p378 = pneg %p377
        // Predicated region
        $region61: #{tpu_custom_call.1} parent=39 // pred_check
          _
        $region62: #{tpu_custom_call.1} parent=39 // pred_check_branch
          %380 = sbr.rel (%p377) target = $region64
        $region63: #{tpu_custom_call.1} parent=39 // pred_region
          %v381 = vld [vmem:[%s305] sm:$0xf]
          %v382 = vld [vmem:[%s305 + $0x4] sm:$0xf]
          %v383 = vld [vmem:[%s305 + $0x8] sm:$0xf]
          %v384 = vld [vmem:[%s305 + $0xc] sm:$0xf]
          %v385 = vld [vmem:[%s305 + $0x10] sm:$0xf]
          %v386 = vld [vmem:[%s305 + $0x14] sm:$0xf]
          %v387 = vld [vmem:[%s305 + $0x18] sm:$0xf]
          %v388 = vld [vmem:[%s305 + $0x1c] sm:$0xf]
          %v389 = vld [vmem:[%s305 + $0x20] sm:$0xf]
          %v390 = vld [vmem:[%s305 + $0x24] sm:$0xf]
          %v391 = vld [vmem:[%s305 + $0x28] sm:$0xf]
          %v392 = vld [vmem:[%s305 + $0x2c] sm:$0xf]
          %v393 = vld [vmem:[%s305 + $0x30] sm:$0xf]
          %v394 = vld [vmem:[%s305 + $0x34] sm:$0xf]
          %v395 = vld [vmem:[%s305 + $0x38] sm:$0xf]
          %v396 = vld [vmem:[%s305 + $0x3c] sm:$0xf]
          %v397 = vld [vmem:[#allocation8] sm:$0xff]
          %v398 = vld [vmem:[#allocation8 + $0x8] sm:$0xff]
          %v399 = vld [vmem:[#allocation8 + $0x10] sm:$0xff]
          %v400 = vld [vmem:[#allocation8 + $0x18] sm:$0xff]
          %v401 = vld [vmem:[#allocation8 + $0x20] sm:$0xff]
          %v402 = vld [vmem:[#allocation8 + $0x28] sm:$0xff]
          %v403 = vld [vmem:[#allocation8 + $0x30] sm:$0xff]
          %v404 = vld [vmem:[#allocation8 + $0x38] sm:$0xff]
          %v405 = vld [vmem:[#allocation8 + $0x40] sm:$0xff]
          %v406 = vld [vmem:[#allocation8 + $0x48] sm:$0xff]
          %v407 = vld [vmem:[#allocation8 + $0x50] sm:$0xff]
          %v408 = vld [vmem:[#allocation8 + $0x58] sm:$0xff]
          %v409 = vld [vmem:[#allocation8 + $0x60] sm:$0xff]
          %v410 = vld [vmem:[#allocation8 + $0x68] sm:$0xff]
          %v411 = vld [vmem:[#allocation8 + $0x70] sm:$0xff]
          %v412 = vld [vmem:[#allocation8 + $0x78] sm:$0xff]
          %v413 = vld [vmem:[#allocation10] sm:$0x3]
          %v415 = vlaneseq
          %v416 = vshrl.u32 %v415, 7
          %v417 = vsub.s32 0, %v416
          %v418 = vrot.slane %v413, %v417
          %v419 = vlaneseq
          %v420 = vshrl.u32 %v419, 7
          %v421 = vsub.s32 1, %v420
          %v422 = vrot.slane %v413, %v421
          %v441 = vunpack.c.l.b16 %v381
          %v442 = vunpack.c.l.b16 %v382
          %v443 = vunpack.c.l.b16 %v383
          %v444 = vunpack.c.l.b16 %v384
          %v445 = vunpack.c.l.b16 %v385
          %v446 = vunpack.c.l.b16 %v386
          %v447 = vunpack.c.l.b16 %v387
          %v448 = vunpack.c.l.b16 %v388
          %v449 = vunpack.c.l.b16 %v389
          %v450 = vunpack.c.l.b16 %v390
          %v451 = vunpack.c.l.b16 %v391
          %v452 = vunpack.c.l.b16 %v392
          %v453 = vunpack.c.l.b16 %v393
          %v454 = vunpack.c.l.b16 %v394
          %v455 = vunpack.c.l.b16 %v395
          %v456 = vunpack.c.l.b16 %v396
          %v457 = vpack.c.b16 %v442, %v441
          %v458 = vpack.c.b16 %v444, %v443
          %v459 = vpack.c.b16 %v446, %v445
          %v460 = vpack.c.b16 %v448, %v447
          %v461 = vpack.c.b16 %v450, %v449
          %v462 = vpack.c.b16 %v452, %v451
          %v463 = vpack.c.b16 %v454, %v453
          %v464 = vpack.c.b16 %v456, %v455
          %v489 = vunpack.c.l.b16 %v397
          %v490 = vunpack.c.h.b16 %v397
          %v491 = vunpack.c.l.b16 %v398
          %v492 = vunpack.c.h.b16 %v398
          %v493 = vunpack.c.l.b16 %v399
          %v494 = vunpack.c.h.b16 %v399
          %v495 = vunpack.c.l.b16 %v400
          %v496 = vunpack.c.h.b16 %v400
          %v497 = vunpack.c.l.b16 %v401
          %v498 = vunpack.c.h.b16 %v401
          %v499 = vunpack.c.l.b16 %v402
          %v500 = vunpack.c.h.b16 %v402
          %v501 = vunpack.c.l.b16 %v403
          %v502 = vunpack.c.h.b16 %v403
          %v503 = vunpack.c.l.b16 %v404
          %v504 = vunpack.c.h.b16 %v404
          %v505 = vunpack.c.l.b16 %v405
          %v506 = vunpack.c.h.b16 %v405
          %v507 = vunpack.c.l.b16 %v406
          %v508 = vunpack.c.h.b16 %v406
          %v509 = vunpack.c.l.b16 %v407
          %v510 = vunpack.c.h.b16 %v407
          %v511 = vunpack.c.l.b16 %v408
          %v512 = vunpack.c.h.b16 %v408
          %v513 = vunpack.c.l.b16 %v409
          %v514 = vunpack.c.h.b16 %v409
          %v515 = vunpack.c.l.b16 %v410
          %v516 = vunpack.c.h.b16 %v410
          %v517 = vunpack.c.l.b16 %v411
          %v518 = vunpack.c.h.b16 %v411
          %v519 = vunpack.c.l.b16 %v412
          %v520 = vunpack.c.h.b16 %v412
          %v521 = vpack.c.b16 %v491, %v489
          %v522 = vpack.c.b16 %v492, %v490
          %v523 = vpack.c.b16 %v495, %v493
          %v524 = vpack.c.b16 %v496, %v494
          %v525 = vpack.c.b16 %v499, %v497
          %v526 = vpack.c.b16 %v500, %v498
          %v527 = vpack.c.b16 %v503, %v501
          %v528 = vpack.c.b16 %v504, %v502
          %v529 = vpack.c.b16 %v507, %v505
          %v530 = vpack.c.b16 %v508, %v506
          %v531 = vpack.c.b16 %v511, %v509
          %v532 = vpack.c.b16 %v512, %v510
          %v533 = vpack.c.b16 %v515, %v513
          %v534 = vpack.c.b16 %v516, %v514
          %v535 = vpack.c.b16 %v519, %v517
          %v536 = vpack.c.b16 %v520, %v518
          %553 = vmatprep.subr.bf16.mxu0 %v522
          %554 = vmatpush1.bf16.msra.mxu0 %v521
          %555 = vmatprep.subr.bf16.mxu0 %v524
          %556 = vmatpush1.bf16.msra.mxu0 %v523
          %557 = vmatprep.subr.bf16.mxu0 %v526
          %558 = vmatpush1.bf16.msra.mxu0 %v525
          %559 = vmatprep.subr.bf16.mxu0 %v528
          %560 = vmatpush1.bf16.msra.mxu0 %v527
          %561 = vmatprep.subr.bf16.mxu0 %v530
          %562 = vmatpush1.bf16.msra.mxu0 %v529
          %563 = vmatprep.subr.bf16.mxu0 %v532
          %564 = vmatpush1.bf16.msra.mxu0 %v531
          %565 = vmatprep.subr.bf16.mxu0 %v534
          %566 = vmatpush1.bf16.msra.mxu0 %v533
          %567 = vmatprep.subr.bf16.mxu0 %v536
          %568 = vmatpush1.bf16.msra.mxu0 %v535
          %569 = vmatprep.subr.bf16.mxu0 0
          %570 = vmatpush1.bf16.msra.mxu0 0
          %571 = vmatprep.subr.bf16.mxu0 0
          %572 = vmatpush1.bf16.msra.mxu0 0
          %573 = vmatprep.subr.bf16.mxu0 0
          %574 = vmatpush1.bf16.msra.mxu0 0
          %575 = vmatprep.subr.bf16.mxu0 0
          %576 = vmatpush1.bf16.msra.mxu0 0
          %577 = vmatprep.subr.bf16.mxu0 0
          %578 = vmatpush1.bf16.msra.mxu0 0
          %579 = vmatprep.subr.bf16.mxu0 0
          %580 = vmatpush1.bf16.msra.mxu0 0
          %581 = vmatprep.subr.bf16.mxu0 0
          %582 = vmatpush1.bf16.msra.mxu0 0
          %583 = vmatprep.subr.bf16.mxu0 0
          %584 = vmatpush1.bf16.msra.mxu0 0
          %585 = vmatprep.mubr.bf16.mxu0 0
          %586 = vmatmul.mubr.bf16.gmra.mrb[0].mxu0 %v457
          %v587 = vpop.f32.mrb[0].mxu0
          %v588 = vadd.f32 %v418, %v587
          %v589 = vpop.f32.mrb[0].mxu0
          %v590 = vadd.f32 %v422, %v589
          %v591 = vpop.f32.mrb[0].mxu0
          %v592 = vadd.f32 %v418, %v591
          %v593 = vpop.f32.mrb[0].mxu0
          %v594 = vadd.f32 %v422, %v593
          %595 = vmatprep.mubr.bf16.mxu0 0
          %596 = vmatmul.mubr.bf16.gmra.mrb[0].mxu0 %v458
          %v597 = vpop.f32.mrb[0].mxu0
          %v598 = vadd.f32 %v418, %v597
          %v599 = vpop.f32.mrb[0].mxu0
          %v600 = vadd.f32 %v422, %v599
          %v601 = vpop.f32.mrb[0].mxu0
          %v602 = vadd.f32 %v418, %v601
          %v603 = vpop.f32.mrb[0].mxu0
          %v604 = vadd.f32 %v422, %v603
          %605 = vmatprep.mubr.bf16.mxu0 0
          %606 = vmatmul.mubr.bf16.gmra.mrb[0].mxu0 %v459
          %v607 = vpop.f32.mrb[0].mxu0
          %v608 = vadd.f32 %v418, %v607
          %v609 = vpop.f32.mrb[0].mxu0
          %v610 = vadd.f32 %v422, %v609
          %v611 = vpop.f32.mrb[0].mxu0
          %v612 = vadd.f32 %v418, %v611
          %v613 = vpop.f32.mrb[0].mxu0
          %v614 = vadd.f32 %v422, %v613
          %615 = vmatprep.mubr.bf16.mxu0 0
          %616 = vmatmul.mubr.bf16.gmra.mrb[0].mxu0 %v460
          %v617 = vpop.f32.mrb[0].mxu0
          %v618 = vadd.f32 %v418, %v617
          %v619 = vpop.f32.mrb[0].mxu0
          %v620 = vadd.f32 %v422, %v619
          %v621 = vpop.f32.mrb[0].mxu0
          %v622 = vadd.f32 %v418, %v621
          %v623 = vpop.f32.mrb[0].mxu0
          %v624 = vadd.f32 %v422, %v623
          %625 = vmatprep.mubr.bf16.mxu0 0
          %626 = vmatmul.mubr.bf16.gmra.mrb[0].mxu0 %v461
          %v627 = vpop.f32.mrb[0].mxu0
          %v628 = vadd.f32 %v418, %v627
          %v629 = vpop.f32.mrb[0].mxu0
          %v630 = vadd.f32 %v422, %v629
          %v631 = vpop.f32.mrb[0].mxu0
          %v632 = vadd.f32 %v418, %v631
          %v633 = vpop.f32.mrb[0].mxu0
          %v634 = vadd.f32 %v422, %v633
          %635 = vmatprep.mubr.bf16.mxu0 0
          %636 = vmatmul.mubr.bf16.gmra.mrb[0].mxu0 %v462
          %v637 = vpop.f32.mrb[0].mxu0
          %v638 = vadd.f32 %v418, %v637
          %v639 = vpop.f32.mrb[0].mxu0
          %v640 = vadd.f32 %v422, %v639
          %v641 = vpop.f32.mrb[0].mxu0
          %v642 = vadd.f32 %v418, %v641
          %v643 = vpop.f32.mrb[0].mxu0
          %v644 = vadd.f32 %v422, %v643
          %645 = vmatprep.mubr.bf16.mxu0 0
          %646 = vmatmul.mubr.bf16.gmra.mrb[0].mxu0 %v463
          %v647 = vpop.f32.mrb[0].mxu0
          %v648 = vadd.f32 %v418, %v647
          %v649 = vpop.f32.mrb[0].mxu0
          %v650 = vadd.f32 %v422, %v649
          %v651 = vpop.f32.mrb[0].mxu0
          %v652 = vadd.f32 %v418, %v651
          %v653 = vpop.f32.mrb[0].mxu0
          %v654 = vadd.f32 %v422, %v653
          %655 = vmatprep.mubr.bf16.mxu0 0
          %656 = vmatmul.mubr.bf16.gmra.mrb[0].mxu0 %v464
          %v657 = vpop.f32.mrb[0].mxu0
          %v658 = vadd.f32 %v418, %v657
          %v659 = vpop.f32.mrb[0].mxu0
          %v660 = vadd.f32 %v422, %v659
          %v661 = vpop.f32.mrb[0].mxu0
          %v662 = vadd.f32 %v418, %v661
          %v663 = vpop.f32.mrb[0].mxu0
          %v664 = vadd.f32 %v422, %v663
          %665 = vdwg.mxu0
          %v666 = vtanh.pop %v588
          %v667 = vtanh.pop %v590
          %v668 = vtanh.pop %v592
          %v669 = vtanh.pop %v594
          %v670 = vtanh.pop %v598
          %v671 = vtanh.pop %v600
          %v672 = vtanh.pop %v602
          %v673 = vtanh.pop %v604
          %v674 = vtanh.pop %v608
          %v675 = vtanh.pop %v610
          %v676 = vtanh.pop %v612
          %v677 = vtanh.pop %v614
          %v678 = vtanh.pop %v618
          %v679 = vtanh.pop %v620
          %v680 = vtanh.pop %v622
          %v681 = vtanh.pop %v624
          %v682 = vtanh.pop %v628
          %v683 = vtanh.pop %v630
          %v684 = vtanh.pop %v632
          %v685 = vtanh.pop %v634
          %v686 = vtanh.pop %v638
          %v687 = vtanh.pop %v640
          %v688 = vtanh.pop %v642
          %v689 = vtanh.pop %v644
          %v690 = vtanh.pop %v648
          %v691 = vtanh.pop %v650
          %v692 = vtanh.pop %v652
          %v693 = vtanh.pop %v654
          %v694 = vtanh.pop %v658
          %v695 = vtanh.pop %v660
          %v696 = vtanh.pop %v662
          %v697 = vtanh.pop %v664
          %v698 = vpack.c.bf16 %v668, %v666
          %v699 = vpack.c.bf16 %v669, %v667
          %v700 = vpack.c.bf16 %v672, %v670
          %v701 = vpack.c.bf16 %v673, %v671
          %v702 = vpack.c.bf16 %v676, %v674
          %v703 = vpack.c.bf16 %v677, %v675
          %v704 = vpack.c.bf16 %v680, %v678
          %v705 = vpack.c.bf16 %v681, %v679
          %v706 = vpack.c.bf16 %v684, %v682
          %v707 = vpack.c.bf16 %v685, %v683
          %v708 = vpack.c.bf16 %v688, %v686
          %v709 = vpack.c.bf16 %v689, %v687
          %v710 = vpack.c.bf16 %v692, %v690
          %v711 = vpack.c.bf16 %v693, %v691
          %v712 = vpack.c.bf16 %v696, %v694
          %v713 = vpack.c.bf16 %v697, %v695
          %714 = vst [vmem:[#allocation2] sm:$0xff] %v698
          %vm715 = vcmask 588800
          %716 = vst.msk [vmem:[#allocation2 + $0x8] sm:$0xff] %vm715, %v699
          %717 = vst [vmem:[#allocation2 + $0x10] sm:$0xff] %v700
          %718 = vst.msk [vmem:[#allocation2 + $0x18] sm:$0xff] %vm715, %v701
          %719 = vst [vmem:[#allocation2 + $0x20] sm:$0xff] %v702
          %720 = vst.msk [vmem:[#allocation2 + $0x28] sm:$0xff] %vm715, %v703
          %721 = vst [vmem:[#allocation2 + $0x30] sm:$0xff] %v704
          %722 = vst.msk [vmem:[#allocation2 + $0x38] sm:$0xff] %vm715, %v705
          %723 = vst [vmem:[#allocation2 + $0x40] sm:$0xff] %v706
          %724 = vst.msk [vmem:[#allocation2 + $0x48] sm:$0xff] %vm715, %v707
          %725 = vst [vmem:[#allocation2 + $0x50] sm:$0xff] %v708
          %726 = vst.msk [vmem:[#allocation2 + $0x58] sm:$0xff] %vm715, %v709
          %727 = vst [vmem:[#allocation2 + $0x60] sm:$0xff] %v710
          %728 = vst.msk [vmem:[#allocation2 + $0x68] sm:$0xff] %vm715, %v711
          %729 = vst [vmem:[#allocation2 + $0x70] sm:$0xff] %v712
          %730 = vst.msk [vmem:[#allocation2 + $0x78] sm:$0xff] %vm715, %v713
          %vm731 = vcmask 7168
          %732 = vst.msk [vmem:[#allocation3] sm:$0xff] %vm731, -inf
          %733 = vst.msk [vmem:[#allocation3 + $0x8] sm:$0xff] %vm731, -inf
          %734 = vst.msk [vmem:[#allocation3 + $0x10] sm:$0xff] %vm731, -inf
          %735 = vst.msk [vmem:[#allocation3 + $0x18] sm:$0xff] %vm731, -inf
          %736 = vst.msk [vmem:[#allocation3 + $0x20] sm:$0xff] %vm731, -inf
          %737 = vst.msk [vmem:[#allocation3 + $0x28] sm:$0xff] %vm731, -inf
          %738 = vst.msk [vmem:[#allocation3 + $0x30] sm:$0xff] %vm731, -inf
          %739 = vst.msk [vmem:[#allocation3 + $0x38] sm:$0xff] %vm731, -inf
          %740 = vst.msk [vmem:[#allocation3 + $0x40] sm:$0xff] %vm731, -inf
          %741 = vst.msk [vmem:[#allocation3 + $0x48] sm:$0xff] %vm731, -inf
          %742 = vst.msk [vmem:[#allocation3 + $0x50] sm:$0xff] %vm731, -inf
          %743 = vst.msk [vmem:[#allocation3 + $0x58] sm:$0xff] %vm731, -inf
          %744 = vst.msk [vmem:[#allocation3 + $0x60] sm:$0xff] %vm731, -inf
          %745 = vst.msk [vmem:[#allocation3 + $0x68] sm:$0xff] %vm731, -inf
          %746 = vst.msk [vmem:[#allocation3 + $0x70] sm:$0xff] %vm731, -inf
          %747 = vst.msk [vmem:[#allocation3 + $0x78] sm:$0xff] %vm731, -inf
          %748 = vst.msk [vmem:[#allocation4] sm:$0xff] %vm731, 0.0
          %749 = vst.msk [vmem:[#allocation4 + $0x8] sm:$0xff] %vm731, 0.0
          %750 = vst.msk [vmem:[#allocation4 + $0x10] sm:$0xff] %vm731, 0.0
          %751 = vst.msk [vmem:[#allocation4 + $0x18] sm:$0xff] %vm731, 0.0
          %752 = vst.msk [vmem:[#allocation4 + $0x20] sm:$0xff] %vm731, 0.0
          %753 = vst.msk [vmem:[#allocation4 + $0x28] sm:$0xff] %vm731, 0.0
          %754 = vst.msk [vmem:[#allocation4 + $0x30] sm:$0xff] %vm731, 0.0
          %755 = vst.msk [vmem:[#allocation4 + $0x38] sm:$0xff] %vm731, 0.0
          %756 = vst.msk [vmem:[#allocation4 + $0x40] sm:$0xff] %vm731, 0.0
          %757 = vst.msk [vmem:[#allocation4 + $0x48] sm:$0xff] %vm731, 0.0
          %758 = vst.msk [vmem:[#allocation4 + $0x50] sm:$0xff] %vm731, 0.0
          %759 = vst.msk [vmem:[#allocation4 + $0x58] sm:$0xff] %vm731, 0.0
          %760 = vst.msk [vmem:[#allocation4 + $0x60] sm:$0xff] %vm731, 0.0
          %761 = vst.msk [vmem:[#allocation4 + $0x68] sm:$0xff] %vm731, 0.0
          %762 = vst.msk [vmem:[#allocation4 + $0x70] sm:$0xff] %vm731, 0.0
          %763 = vst.msk [vmem:[#allocation4 + $0x78] sm:$0xff] %vm731, 0.0
        $region64: #{tpu_custom_call.1} parent=39 // pred_fallthru
          _
        %v764 = vld [vmem:[#allocation2] sm:$0xff]
        %v765 = vld [vmem:[#allocation2 + $0x8] sm:$0xff]
        %v766 = vld [vmem:[#allocation2 + $0x10] sm:$0xff]
        %v767 = vld [vmem:[#allocation2 + $0x18] sm:$0xff]
        %v768 = vld [vmem:[#allocation2 + $0x20] sm:$0xff]
        %v769 = vld [vmem:[#allocation2 + $0x28] sm:$0xff]
        %v770 = vld [vmem:[#allocation2 + $0x30] sm:$0xff]
        %v771 = vld [vmem:[#allocation2 + $0x38] sm:$0xff]
        %v772 = vld [vmem:[#allocation2 + $0x40] sm:$0xff]
        %v773 = vld [vmem:[#allocation2 + $0x48] sm:$0xff]
        %v774 = vld [vmem:[#allocation2 + $0x50] sm:$0xff]
        %v775 = vld [vmem:[#allocation2 + $0x58] sm:$0xff]
        %v776 = vld [vmem:[#allocation2 + $0x60] sm:$0xff]
        %v777 = vld [vmem:[#allocation2 + $0x68] sm:$0xff]
        %v778 = vld [vmem:[#allocation2 + $0x70] sm:$0xff]
        %v779 = vld [vmem:[#allocation2 + $0x78] sm:$0xff]
        %v780 = vld [vmem:[%s322] sm:$0xff]
        %v781 = vld [vmem:[%s322 + $0x8] sm:$0xff]
        %v782 = vld [vmem:[%s322 + $0x10] sm:$0xff]
        %v783 = vld [vmem:[%s322 + $0x18] sm:$0xff]
        %v784 = vld [vmem:[%s322 + $0x20] sm:$0xff]
        %v785 = vld [vmem:[%s322 + $0x28] sm:$0xff]
        %v786 = vld [vmem:[%s322 + $0x30] sm:$0xff]
        %v787 = vld [vmem:[%s322 + $0x38] sm:$0xff]
        %v788 = vld [vmem:[%s322 + $0x40] sm:$0xff]
        %v789 = vld [vmem:[%s322 + $0x48] sm:$0xff]
        %v790 = vld [vmem:[%s322 + $0x50] sm:$0xff]
        %v791 = vld [vmem:[%s322 + $0x58] sm:$0xff]
        %v792 = vld [vmem:[%s322 + $0x60] sm:$0xff]
        %v793 = vld [vmem:[%s322 + $0x68] sm:$0xff]
        %v794 = vld [vmem:[%s322 + $0x70] sm:$0xff]
        %v795 = vld [vmem:[%s322 + $0x78] sm:$0xff]
        %v796 = vld [vmem:[%s322 + $0x80] sm:$0xff]
        %v797 = vld [vmem:[%s322 + $0x88] sm:$0xff]
        %v798 = vld [vmem:[%s322 + $0x90] sm:$0xff]
        %v799 = vld [vmem:[%s322 + $0x98] sm:$0xff]
        %v800 = vld [vmem:[%s322 + $0xa0] sm:$0xff]
        %v801 = vld [vmem:[%s322 + $0xa8] sm:$0xff]
        %v802 = vld [vmem:[%s322 + $0xb0] sm:$0xff]
        %v803 = vld [vmem:[%s322 + $0xb8] sm:$0xff]
        %v804 = vld [vmem:[%s322 + $0xc0] sm:$0xff]
        %v805 = vld [vmem:[%s331] sm:$0x3]
        %v807 = vlaneseq
        %v808 = vshrl.u32 %v807, 7
        %v809 = vsub.s32 0, %v808
        %v810 = vrot.slane %v805, %v809
        %v811 = vlaneseq
        %v812 = vshrl.u32 %v811, 7
        %v813 = vsub.s32 1, %v812
        %v814 = vrot.slane %v805, %v813
        %v842 = vunpack.c.l.b16 %v780
        %v843 = vunpack.c.h.b16 %v780
        %v844 = vunpack.c.l.b16 %v781
        %v845 = vunpack.c.h.b16 %v781
        %v846 = vunpack.c.l.b16 %v782
        %v847 = vunpack.c.h.b16 %v782
        %v848 = vunpack.c.l.b16 %v783
        %v849 = vunpack.c.h.b16 %v783
        %v850 = vunpack.c.l.b16 %v784
        %v851 = vunpack.c.h.b16 %v784
        %v852 = vunpack.c.l.b16 %v785
        %v853 = vunpack.c.h.b16 %v785
        %v854 = vunpack.c.l.b16 %v786
        %v855 = vunpack.c.h.b16 %v786
        %v856 = vunpack.c.l.b16 %v787
        %v857 = vunpack.c.h.b16 %v787
        %v858 = vunpack.c.l.b16 %v788
        %v859 = vunpack.c.h.b16 %v788
        %v860 = vunpack.c.l.b16 %v789
        %v861 = vunpack.c.h.b16 %v789
        %v862 = vunpack.c.l.b16 %v790
        %v863 = vunpack.c.h.b16 %v790
        %v864 = vunpack.c.l.b16 %v791
        %v865 = vunpack.c.h.b16 %v791
        %v866 = vunpack.c.l.b16 %v792
        %v867 = vunpack.c.h.b16 %v792
        %v868 = vunpack.c.l.b16 %v793
        %v869 = vunpack.c.h.b16 %v793
        %v870 = vunpack.c.l.b16 %v794
        %v871 = vunpack.c.h.b16 %v794
        %v872 = vunpack.c.l.b16 %v795
        %v873 = vunpack.c.h.b16 %v795
        %v874 = vunpack.c.l.b16 %v796
        %v875 = vunpack.c.h.b16 %v796
        %v876 = vunpack.c.l.b16 %v797
        %v877 = vunpack.c.h.b16 %v797
        %v878 = vunpack.c.l.b16 %v798
        %v879 = vunpack.c.h.b16 %v798
        %v880 = vunpack.c.l.b16 %v799
        %v881 = vunpack.c.h.b16 %v799
        %v882 = vunpack.c.l.b16 %v800
        %v883 = vunpack.c.h.b16 %v800
        %v884 = vunpack.c.l.b16 %v801
        %v885 = vunpack.c.h.b16 %v801
        %v886 = vunpack.c.l.b16 %v802
        %v887 = vunpack.c.h.b16 %v802
        %v888 = vunpack.c.l.b16 %v803
        %v889 = vunpack.c.h.b16 %v803
        %v890 = vunpack.c.l.b16 %v804
        %v891 = vunpack.c.h.b16 %v804
        %v892 = vpack.c.b16 %v844, %v842
        %v893 = vpack.c.b16 %v845, %v843
        %v894 = vpack.c.b16 %v848, %v846
        %v895 = vpack.c.b16 %v849, %v847
        %v896 = vpack.c.b16 %v852, %v850
        %v897 = vpack.c.b16 %v853, %v851
        %v898 = vpack.c.b16 %v856, %v854
        %v899 = vpack.c.b16 %v857, %v855
        %v900 = vpack.c.b16 %v860, %v858
        %v901 = vpack.c.b16 %v861, %v859
        %v902 = vpack.c.b16 %v864, %v862
        %v903 = vpack.c.b16 %v865, %v863
        %v904 = vpack.c.b16 %v868, %v866
        %v905 = vpack.c.b16 %v869, %v867
        %v906 = vpack.c.b16 %v872, %v870
        %v907 = vpack.c.b16 %v873, %v871
        %v908 = vpack.c.b16 %v876, %v874
        %v909 = vpack.c.b16 %v877, %v875
        %v910 = vpack.c.b16 %v880, %v878
        %v911 = vpack.c.b16 %v881, %v879
        %v912 = vpack.c.b16 %v884, %v882
        %v913 = vpack.c.b16 %v885, %v883
        %v914 = vpack.c.b16 %v888, %v886
        %v915 = vpack.c.b16 %v889, %v887
        %v916 = vpack.c.b16 %v890, %v890
        %v917 = vpack.c.b16 %v891, %v891
        %vm942 = vcmask 588800
        %v944 = vsel %vm942, %v765, 0
        %v947 = vsel %vm942, %v767, 0
        %v950 = vsel %vm942, %v769, 0
        %v953 = vsel %vm942, %v771, 0
        %v956 = vsel %vm942, %v773, 0
        %v959 = vsel %vm942, %v775, 0
        %v962 = vsel %vm942, %v777, 0
        %v965 = vsel %vm942, %v779, 0
        %vm967 = vcmask 1043456
        %v969 = vsel %vm967, %v916, 0
        %v972 = vsel %vm967, %v917, 0
        %974 = vmatprep.subr.bf16.mxu0 %v893
        %975 = vmatpush1.bf16.msra.mxu0 %v892
        %976 = vmatprep.subr.bf16.mxu0 %v895
        %977 = vmatpush1.bf16.msra.mxu0 %v894
        %978 = vmatprep.subr.bf16.mxu0 %v897
        %979 = vmatpush1.bf16.msra.mxu0 %v896
        %980 = vmatprep.subr.bf16.mxu0 %v899
        %981 = vmatpush1.bf16.msra.mxu0 %v898
        %982 = vmatprep.subr.bf16.mxu0 %v901
        %983 = vmatpush1.bf16.msra.mxu0 %v900
        %984 = vmatprep.subr.bf16.mxu0 %v903
        %985 = vmatpush1.bf16.msra.mxu0 %v902
        %986 = vmatprep.subr.bf16.mxu0 %v905
        %987 = vmatpush1.bf16.msra.mxu0 %v904
        %988 = vmatprep.subr.bf16.mxu0 %v907
        %989 = vmatpush1.bf16.msra.mxu0 %v906
        %990 = vmatprep.subr.bf16.mxu0 %v909
        %991 = vmatpush1.bf16.msra.mxu0 %v908
        %992 = vmatprep.subr.bf16.mxu0 %v911
        %993 = vmatpush1.bf16.msra.mxu0 %v910
        %994 = vmatprep.subr.bf16.mxu0 %v913
        %995 = vmatpush1.bf16.msra.mxu0 %v912
        %996 = vmatprep.subr.bf16.mxu0 %v915
        %997 = vmatpush1.bf16.msra.mxu0 %v914
        %998 = vmatprep.subr.bf16.mxu0 %v972
        %999 = vmatpush1.bf16.msra.mxu0 %v969
        %1000 = vmatprep.subr.bf16.mxu0 0
        %1001 = vmatpush1.bf16.msra.mxu0 0
        %1002 = vmatprep.subr.bf16.mxu0 0
        %1003 = vmatpush1.bf16.msra.mxu0 0
        %1004 = vmatprep.subr.bf16.mxu0 0
        %1005 = vmatpush1.bf16.msra.mxu0 0
        %1006 = vmatprep.mubr.bf16.mxu0 %v944
        %1007 = vmatmul.mubr.bf16.gmra.mrb[0].mxu0 %v764
        %v1008 = vpop.f32.mrb[0].mxu0
        %v1009 = vadd.f32 %v810, %v1008
        %v1010 = vpop.f32.mrb[0].mxu0
        %v1011 = vadd.f32 %v814, %v1010
        %v1012 = vpop.f32.mrb[0].mxu0
        %v1013 = vadd.f32 %v810, %v1012
        %v1014 = vpop.f32.mrb[0].mxu0
        %v1015 = vadd.f32 %v814, %v1014
        %1016 = vmatprep.mubr.bf16.mxu0 %v947
        %1017 = vmatmul.mubr.bf16.gmra.mrb[0].mxu0 %v766
        %v1018 = vpop.f32.mrb[0].mxu0
        %v1019 = vadd.f32 %v810, %v1018
        %v1020 = vpop.f32.mrb[0].mxu0
        %v1021 = vadd.f32 %v814, %v1020
        %v1022 = vpop.f32.mrb[0].mxu0
        %v1023 = vadd.f32 %v810, %v1022
        %v1024 = vpop.f32.mrb[0].mxu0
        %v1025 = vadd.f32 %v814, %v1024
        %1026 = vmatprep.mubr.bf16.mxu0 %v950
        %1027 = vmatmul.mubr.bf16.gmra.mrb[0].mxu0 %v768
        %v1028 = vpop.f32.mrb[0].mxu0
        %v1029 = vadd.f32 %v810, %v1028
        %v1030 = vpop.f32.mrb[0].mxu0
        %v1031 = vadd.f32 %v814, %v1030
        %v1032 = vpop.f32.mrb[0].mxu0
        %v1033 = vadd.f32 %v810, %v1032
        %v1034 = vpop.f32.mrb[0].mxu0
        %v1035 = vadd.f32 %v814, %v1034
        %1036 = vmatprep.mubr.bf16.mxu0 %v953
        %1037 = vmatmul.mubr.bf16.gmra.mrb[0].mxu0 %v770
        %v1038 = vpop.f32.mrb[0].mxu0
        %v1039 = vadd.f32 %v810, %v1038
        %v1040 = vpop.f32.mrb[0].mxu0
        %v1041 = vadd.f32 %v814, %v1040
        %v1042 = vpop.f32.mrb[0].mxu0
        %v1043 = vadd.f32 %v810, %v1042
        %v1044 = vpop.f32.mrb[0].mxu0
        %v1045 = vadd.f32 %v814, %v1044
        %1046 = vmatprep.mubr.bf16.mxu0 %v956
        %1047 = vmatmul.mubr.bf16.gmra.mrb[0].mxu0 %v772
        %v1048 = vpop.f32.mrb[0].mxu0
        %v1049 = vadd.f32 %v810, %v1048
        %v1050 = vpop.f32.mrb[0].mxu0
        %v1051 = vadd.f32 %v814, %v1050
        %v1052 = vpop.f32.mrb[0].mxu0
        %v1053 = vadd.f32 %v810, %v1052
        %v1054 = vpop.f32.mrb[0].mxu0
        %v1055 = vadd.f32 %v814, %v1054
        %1056 = vmatprep.mubr.bf16.mxu0 %v959
        %1057 = vmatmul.mubr.bf16.gmra.mrb[0].mxu0 %v774
        %v1058 = vpop.f32.mrb[0].mxu0
        %v1059 = vadd.f32 %v810, %v1058
        %v1060 = vpop.f32.mrb[0].mxu0
        %v1061 = vadd.f32 %v814, %v1060
        %v1062 = vpop.f32.mrb[0].mxu0
        %v1063 = vadd.f32 %v810, %v1062
        %v1064 = vpop.f32.mrb[0].mxu0
        %v1065 = vadd.f32 %v814, %v1064
        %1066 = vmatprep.mubr.bf16.mxu0 %v962
        %1067 = vmatmul.mubr.bf16.gmra.mrb[0].mxu0 %v776
        %v1068 = vpop.f32.mrb[0].mxu0
        %v1069 = vadd.f32 %v810, %v1068
        %v1070 = vpop.f32.mrb[0].mxu0
        %v1071 = vadd.f32 %v814, %v1070
        %v1072 = vpop.f32.mrb[0].mxu0
        %v1073 = vadd.f32 %v810, %v1072
        %v1074 = vpop.f32.mrb[0].mxu0
        %v1075 = vadd.f32 %v814, %v1074
        %1076 = vmatprep.mubr.bf16.mxu0 %v965
        %1077 = vmatmul.mubr.bf16.gmra.mrb[0].mxu0 %v778
        %v1078 = vpop.f32.mrb[0].mxu0
        %v1079 = vadd.f32 %v810, %v1078
        %v1080 = vpop.f32.mrb[0].mxu0
        %v1081 = vadd.f32 %v814, %v1080
        %v1082 = vpop.f32.mrb[0].mxu0
        %v1083 = vadd.f32 %v810, %v1082
        %v1084 = vpop.f32.mrb[0].mxu0
        %v1085 = vadd.f32 %v814, %v1084
        %1086 = vdwg.mxu0
        // Predicated region
        $region65: #{tpu_custom_call.1} parent=39 // pred_check
          %p1087 = pneg %p375
        $region66: #{tpu_custom_call.1} parent=39 // pred_check_branch
          %1089 = sbr.rel (%p1087) target = $region68
        $region67: #{tpu_custom_call.1} parent=39 // pred_region
          %v1090 = vld [vmem:[#allocation3] sm:$0xff]
          %v1091 = vld [vmem:[#allocation3 + $0x8] sm:$0xff]
          %v1092 = vld [vmem:[#allocation3 + $0x10] sm:$0xff]
          %v1093 = vld [vmem:[#allocation3 + $0x18] sm:$0xff]
          %v1094 = vld [vmem:[#allocation3 + $0x20] sm:$0xff]
          %v1095 = vld [vmem:[#allocation3 + $0x28] sm:$0xff]
          %v1096 = vld [vmem:[#allocation3 + $0x30] sm:$0xff]
          %v1097 = vld [vmem:[#allocation3 + $0x38] sm:$0xff]
          %v1098 = vld [vmem:[#allocation3 + $0x40] sm:$0xff]
          %v1099 = vld [vmem:[#allocation3 + $0x48] sm:$0xff]
          %v1100 = vld [vmem:[#allocation3 + $0x50] sm:$0xff]
          %v1101 = vld [vmem:[#allocation3 + $0x58] sm:$0xff]
          %v1102 = vld [vmem:[#allocation3 + $0x60] sm:$0xff]
          %v1103 = vld [vmem:[#allocation3 + $0x68] sm:$0xff]
          %v1104 = vld [vmem:[#allocation3 + $0x70] sm:$0xff]
          %v1105 = vld [vmem:[#allocation3 + $0x78] sm:$0xff]
          %v1106 = vmax.f32 %v1009, %v1011
          %1107 = vmax.xlane.f32.xlu0 %v1106
          %v1108 = vpop.xlane.xlu0 %1107
          %v1109 = vmax.f32 %v1013, %v1015
          %1110 = vmax.xlane.f32.xlu0 %v1109
          %v1111 = vpop.xlane.xlu0 %1110
          %v1112 = vmax.f32 %v1019, %v1021
          %1113 = vmax.xlane.f32.xlu0 %v1112
          %v1114 = vpop.xlane.xlu0 %1113
          %v1115 = vmax.f32 %v1023, %v1025
          %1116 = vmax.xlane.f32.xlu0 %v1115
          %v1117 = vpop.xlane.xlu0 %1116
          %v1118 = vmax.f32 %v1029, %v1031
          %1119 = vmax.xlane.f32.xlu0 %v1118
          %v1120 = vpop.xlane.xlu0 %1119
          %v1121 = vmax.f32 %v1033, %v1035
          %1122 = vmax.xlane.f32.xlu0 %v1121
          %v1123 = vpop.xlane.xlu0 %1122
          %v1124 = vmax.f32 %v1039, %v1041
          %1125 = vmax.xlane.f32.xlu0 %v1124
          %v1126 = vpop.xlane.xlu0 %1125
          %v1127 = vmax.f32 %v1043, %v1045
          %1128 = vmax.xlane.f32.xlu0 %v1127
          %v1129 = vpop.xlane.xlu0 %1128
          %v1130 = vmax.f32 %v1049, %v1051
          %1131 = vmax.xlane.f32.xlu0 %v1130
          %v1132 = vpop.xlane.xlu0 %1131
          %v1133 = vmax.f32 %v1053, %v1055
          %1134 = vmax.xlane.f32.xlu0 %v1133
          %v1135 = vpop.xlane.xlu0 %1134
          %v1136 = vmax.f32 %v1059, %v1061
          %1137 = vmax.xlane.f32.xlu0 %v1136
          %v1138 = vpop.xlane.xlu0 %1137
          %v1139 = vmax.f32 %v1063, %v1065
          %1140 = vmax.xlane.f32.xlu0 %v1139
          %v1141 = vpop.xlane.xlu0 %1140
          %v1142 = vmax.f32 %v1069, %v1071
          %1143 = vmax.xlane.f32.xlu0 %v1142
          %v1144 = vpop.xlane.xlu0 %1143
          %v1145 = vmax.f32 %v1073, %v1075
          %1146 = vmax.xlane.f32.xlu0 %v1145
          %v1147 = vpop.xlane.xlu0 %1146
          %v1148 = vmax.f32 %v1079, %v1081
          %1149 = vmax.xlane.f32.xlu0 %v1148
          %v1150 = vpop.xlane.xlu0 %1149
          %v1151 = vmax.f32 %v1083, %v1085
          %1152 = vmax.xlane.f32.xlu0 %v1151
          %v1153 = vpop.xlane.xlu0 %1152
          %v1154 = vmax.f32 %v1090, %v1108
          %v1155 = vmax.f32 %v1091, %v1111
          %v1156 = vmax.f32 %v1092, %v1114
          %v1157 = vmax.f32 %v1093, %v1117
          %v1158 = vmax.f32 %v1094, %v1120
          %v1159 = vmax.f32 %v1095, %v1123
          %v1160 = vmax.f32 %v1096, %v1126
          %v1161 = vmax.f32 %v1097, %v1129
          %v1162 = vmax.f32 %v1098, %v1132
          %v1163 = vmax.f32 %v1099, %v1135
          %v1164 = vmax.f32 %v1100, %v1138
          %v1165 = vmax.f32 %v1101, %v1141
          %v1166 = vmax.f32 %v1102, %v1144
          %v1167 = vmax.f32 %v1103, %v1147
          %v1168 = vmax.f32 %v1104, %v1150
          %v1169 = vmax.f32 %v1105, %v1153
          %v1170 = vld [vmem:[#allocation4] sm:$0xff]
          %v1171 = vld [vmem:[#allocation4 + $0x8] sm:$0xff]
          %v1172 = vld [vmem:[#allocation4 + $0x10] sm:$0xff]
          %v1173 = vld [vmem:[#allocation4 + $0x18] sm:$0xff]
          %v1174 = vld [vmem:[#allocation4 + $0x20] sm:$0xff]
          %v1175 = vld [vmem:[#allocation4 + $0x28] sm:$0xff]
          %v1176 = vld [vmem:[#allocation4 + $0x30] sm:$0xff]
          %v1177 = vld [vmem:[#allocation4 + $0x38] sm:$0xff]
          %v1178 = vld [vmem:[#allocation4 + $0x40] sm:$0xff]
          %v1179 = vld [vmem:[#allocation4 + $0x48] sm:$0xff]
          %v1180 = vld [vmem:[#allocation4 + $0x50] sm:$0xff]
          %v1181 = vld [vmem:[#allocation4 + $0x58] sm:$0xff]
          %v1182 = vld [vmem:[#allocation4 + $0x60] sm:$0xff]
          %v1183 = vld [vmem:[#allocation4 + $0x68] sm:$0xff]
          %v1184 = vld [vmem:[#allocation4 + $0x70] sm:$0xff]
          %v1185 = vld [vmem:[#allocation4 + $0x78] sm:$0xff]
          %v1186 = vsub.f32 %v1090, %v1154
          %v1187 = vsub.f32 %v1091, %v1155
          %v1188 = vsub.f32 %v1092, %v1156
          %v1189 = vsub.f32 %v1093, %v1157
          %v1190 = vsub.f32 %v1094, %v1158
          %v1191 = vsub.f32 %v1095, %v1159
          %v1192 = vsub.f32 %v1096, %v1160
          %v1193 = vsub.f32 %v1097, %v1161
          %v1194 = vsub.f32 %v1098, %v1162
          %v1195 = vsub.f32 %v1099, %v1163
          %v1196 = vsub.f32 %v1100, %v1164
          %v1197 = vsub.f32 %v1101, %v1165
          %v1198 = vsub.f32 %v1102, %v1166
          %v1199 = vsub.f32 %v1103, %v1167
          %v1200 = vsub.f32 %v1104, %v1168
          %v1201 = vsub.f32 %v1105, %v1169
          %v1202 = vmul.f32 %v1186, 1.442695
          %v1203 = vpow.pop %v1202
          %v1204 = vmul.f32 %v1187, 1.442695
          %v1205 = vpow.pop %v1204
          %v1206 = vmul.f32 %v1188, 1.442695
          %v1207 = vpow.pop %v1206
          %v1208 = vmul.f32 %v1189, 1.442695
          %v1209 = vpow.pop %v1208
          %v1210 = vmul.f32 %v1190, 1.442695
          %v1211 = vpow.pop %v1210
          %v1212 = vmul.f32 %v1191, 1.442695
          %v1213 = vpow.pop %v1212
          %v1214 = vmul.f32 %v1192, 1.442695
          %v1215 = vpow.pop %v1214
          %v1216 = vmul.f32 %v1193, 1.442695
          %v1217 = vpow.pop %v1216
          %v1218 = vmul.f32 %v1194, 1.442695
          %v1219 = vpow.pop %v1218
          %v1220 = vmul.f32 %v1195, 1.442695
          %v1221 = vpow.pop %v1220
          %v1222 = vmul.f32 %v1196, 1.442695
          %v1223 = vpow.pop %v1222
          %v1224 = vmul.f32 %v1197, 1.442695
          %v1225 = vpow.pop %v1224
          %v1226 = vmul.f32 %v1198, 1.442695
          %v1227 = vpow.pop %v1226
          %v1228 = vmul.f32 %v1199, 1.442695
          %v1229 = vpow.pop %v1228
          %v1230 = vmul.f32 %v1200, 1.442695
          %v1231 = vpow.pop %v1230
          %v1232 = vmul.f32 %v1201, 1.442695
          %v1233 = vpow.pop %v1232
          %v1234 = vmul.f32 %v1170, %v1203
          %v1235 = vmul.f32 %v1171, %v1205
          %v1236 = vmul.f32 %v1172, %v1207
          %v1237 = vmul.f32 %v1173, %v1209
          %v1238 = vmul.f32 %v1174, %v1211
          %v1239 = vmul.f32 %v1175, %v1213
          %v1240 = vmul.f32 %v1176, %v1215
          %v1241 = vmul.f32 %v1177, %v1217
          %v1242 = vmul.f32 %v1178, %v1219
          %v1243 = vmul.f32 %v1179, %v1221
          %v1244 = vmul.f32 %v1180, %v1223
          %v1245 = vmul.f32 %v1181, %v1225
          %v1246 = vmul.f32 %v1182, %v1227
          %v1247 = vmul.f32 %v1183, %v1229
          %v1248 = vmul.f32 %v1184, %v1231
          %v1249 = vmul.f32 %v1185, %v1233
          %1251 = vset.pattern.permute.xlu0 0
          %1252 = vperm.xlu0 %1251, %v1154
          %v1253 = vpop.permute.xlu0 %1252
          %1256 = vset.pattern.permute.xlu0 0
          %1257 = vperm.xlu0 %1256, %v1155
          %v1258 = vpop.permute.xlu0 %1257
          %1261 = vset.pattern.permute.xlu0 0
          %1262 = vperm.xlu0 %1261, %v1156
          %v1263 = vpop.permute.xlu0 %1262
          %1266 = vset.pattern.permute.xlu0 0
          %1267 = vperm.xlu0 %1266, %v1157
          %v1268 = vpop.permute.xlu0 %1267
          %1271 = vset.pattern.permute.xlu0 0
          %1272 = vperm.xlu0 %1271, %v1158
          %v1273 = vpop.permute.xlu0 %1272
          %1276 = vset.pattern.permute.xlu0 0
          %1277 = vperm.xlu0 %1276, %v1159
          %v1278 = vpop.permute.xlu0 %1277
          %1281 = vset.pattern.permute.xlu0 0
          %1282 = vperm.xlu0 %1281, %v1160
          %v1283 = vpop.permute.xlu0 %1282
          %1286 = vset.pattern.permute.xlu0 0
          %1287 = vperm.xlu0 %1286, %v1161
          %v1288 = vpop.permute.xlu0 %1287
          %1291 = vset.pattern.permute.xlu0 0
          %1292 = vperm.xlu0 %1291, %v1162
          %v1293 = vpop.permute.xlu0 %1292
          %1296 = vset.pattern.permute.xlu0 0
          %1297 = vperm.xlu0 %1296, %v1163
          %v1298 = vpop.permute.xlu0 %1297
          %1301 = vset.pattern.permute.xlu0 0
          %1302 = vperm.xlu0 %1301, %v1164
          %v1303 = vpop.permute.xlu0 %1302
          %1306 = vset.pattern.permute.xlu0 0
          %1307 = vperm.xlu0 %1306, %v1165
          %v1308 = vpop.permute.xlu0 %1307
          %1311 = vset.pattern.permute.xlu0 0
          %1312 = vperm.xlu0 %1311, %v1166
          %v1313 = vpop.permute.xlu0 %1312
          %1316 = vset.pattern.permute.xlu0 0
          %1317 = vperm.xlu0 %1316, %v1167
          %v1318 = vpop.permute.xlu0 %1317
          %1321 = vset.pattern.permute.xlu0 0
          %1322 = vperm.xlu0 %1321, %v1168
          %v1323 = vpop.permute.xlu0 %1322
          %1326 = vset.pattern.permute.xlu0 0
          %1327 = vperm.xlu0 %1326, %v1169
          %v1328 = vpop.permute.xlu0 %1327
          %v1330 = vsub.f32 %v1009, %v1253
          %v1331 = vsub.f32 %v1011, %v1253
          %v1332 = vsub.f32 %v1013, %v1258
          %v1333 = vsub.f32 %v1015, %v1258
          %v1334 = vsub.f32 %v1019, %v1263
          %v1335 = vsub.f32 %v1021, %v1263
          %v1336 = vsub.f32 %v1023, %v1268
          %v1337 = vsub.f32 %v1025, %v1268
          %v1338 = vsub.f32 %v1029, %v1273
          %v1339 = vsub.f32 %v1031, %v1273
          %v1340 = vsub.f32 %v1033, %v1278
          %v1341 = vsub.f32 %v1035, %v1278
          %v1342 = vsub.f32 %v1039, %v1283
          %v1343 = vsub.f32 %v1041, %v1283
          %v1344 = vsub.f32 %v1043, %v1288
          %v1345 = vsub.f32 %v1045, %v1288
          %v1346 = vsub.f32 %v1049, %v1293
          %v1347 = vsub.f32 %v1051, %v1293
          %v1348 = vsub.f32 %v1053, %v1298
          %v1349 = vsub.f32 %v1055, %v1298
          %v1350 = vsub.f32 %v1059, %v1303
          %v1351 = vsub.f32 %v1061, %v1303
          %v1352 = vsub.f32 %v1063, %v1308
          %v1353 = vsub.f32 %v1065, %v1308
          %v1354 = vsub.f32 %v1069, %v1313
          %v1355 = vsub.f32 %v1071, %v1313
          %v1356 = vsub.f32 %v1073, %v1318
          %v1357 = vsub.f32 %v1075, %v1318
          %v1358 = vsub.f32 %v1079, %v1323
          %v1359 = vsub.f32 %v1081, %v1323
          %v1360 = vsub.f32 %v1083, %v1328
          %v1361 = vsub.f32 %v1085, %v1328
          %v1362 = vmul.f32 %v1330, 1.442695
          %v1363 = vpow.pop %v1362
          %v1364 = vmul.f32 %v1331, 1.442695
          %v1365 = vpow.pop %v1364
          %v1366 = vmul.f32 %v1332, 1.442695
          %v1367 = vpow.pop %v1366
          %v1368 = vmul.f32 %v1333, 1.442695
          %v1369 = vpow.pop %v1368
          %v1370 = vmul.f32 %v1334, 1.442695
          %v1371 = vpow.pop %v1370
          %v1372 = vmul.f32 %v1335, 1.442695
          %v1373 = vpow.pop %v1372
          %v1374 = vmul.f32 %v1336, 1.442695
          %v1375 = vpow.pop %v1374
          %v1376 = vmul.f32 %v1337, 1.442695
          %v1377 = vpow.pop %v1376
          %v1378 = vmul.f32 %v1338, 1.442695
          %v1379 = vpow.pop %v1378
          %v1380 = vmul.f32 %v1339, 1.442695
          %v1381 = vpow.pop %v1380
          %v1382 = vmul.f32 %v1340, 1.442695
          %v1383 = vpow.pop %v1382
          %v1384 = vmul.f32 %v1341, 1.442695
          %v1385 = vpow.pop %v1384
          %v1386 = vmul.f32 %v1342, 1.442695
          %v1387 = vpow.pop %v1386
          %v1388 = vmul.f32 %v1343, 1.442695
          %v1389 = vpow.pop %v1388
          %v1390 = vmul.f32 %v1344, 1.442695
          %v1391 = vpow.pop %v1390
          %v1392 = vmul.f32 %v1345, 1.442695
          %v1393 = vpow.pop %v1392
          %v1394 = vmul.f32 %v1346, 1.442695
          %v1395 = vpow.pop %v1394
          %v1396 = vmul.f32 %v1347, 1.442695
          %v1397 = vpow.pop %v1396
          %v1398 = vmul.f32 %v1348, 1.442695
          %v1399 = vpow.pop %v1398
          %v1400 = vmul.f32 %v1349, 1.442695
          %v1401 = vpow.pop %v1400
          %v1402 = vmul.f32 %v1350, 1.442695
          %v1403 = vpow.pop %v1402
          %v1404 = vmul.f32 %v1351, 1.442695
          %v1405 = vpow.pop %v1404
          %v1406 = vmul.f32 %v1352, 1.442695
          %v1407 = vpow.pop %v1406
          %v1408 = vmul.f32 %v1353, 1.442695
          %v1409 = vpow.pop %v1408
          %v1410 = vmul.f32 %v1354, 1.442695
          %v1411 = vpow.pop %v1410
          %v1412 = vmul.f32 %v1355, 1.442695
          %v1413 = vpow.pop %v1412
          %v1414 = vmul.f32 %v1356, 1.442695
          %v1415 = vpow.pop %v1414
          %v1416 = vmul.f32 %v1357, 1.442695
          %v1417 = vpow.pop %v1416
          %v1418 = vmul.f32 %v1358, 1.442695
          %v1419 = vpow.pop %v1418
          %v1420 = vmul.f32 %v1359, 1.442695
          %v1421 = vpow.pop %v1420
          %v1422 = vmul.f32 %v1360, 1.442695
          %v1423 = vpow.pop %v1422
          %v1424 = vmul.f32 %v1361, 1.442695
          %v1425 = vpow.pop %v1424
          %v1426 = vadd.f32 %v1363, %v1365
          %1427 = vadd.xlane.f32.xlu0 %v1426
          %v1428 = vpop.xlane.xlu0 %1427
          %v1429 = vadd.f32 %v1367, %v1369
          %1430 = vadd.xlane.f32.xlu0 %v1429
          %v1431 = vpop.xlane.xlu0 %1430
          %v1432 = vadd.f32 %v1371, %v1373
          %1433 = vadd.xlane.f32.xlu0 %v1432
          %v1434 = vpop.xlane.xlu0 %1433
          %v1435 = vadd.f32 %v1375, %v1377
          %1436 = vadd.xlane.f32.xlu0 %v1435
          %v1437 = vpop.xlane.xlu0 %1436
          %v1438 = vadd.f32 %v1379, %v1381
          %1439 = vadd.xlane.f32.xlu0 %v1438
          %v1440 = vpop.xlane.xlu0 %1439
          %v1441 = vadd.f32 %v1383, %v1385
          %1442 = vadd.xlane.f32.xlu0 %v1441
          %v1443 = vpop.xlane.xlu0 %1442
          %v1444 = vadd.f32 %v1387, %v1389
          %1445 = vadd.xlane.f32.xlu0 %v1444
          %v1446 = vpop.xlane.xlu0 %1445
          %v1447 = vadd.f32 %v1391, %v1393
          %1448 = vadd.xlane.f32.xlu0 %v1447
          %v1449 = vpop.xlane.xlu0 %1448
          %v1450 = vadd.f32 %v1395, %v1397
          %1451 = vadd.xlane.f32.xlu0 %v1450
          %v1452 = vpop.xlane.xlu0 %1451
          %v1453 = vadd.f32 %v1399, %v1401
          %1454 = vadd.xlane.f32.xlu0 %v1453
          %v1455 = vpop.xlane.xlu0 %1454
          %v1456 = vadd.f32 %v1403, %v1405
          %1457 = vadd.xlane.f32.xlu0 %v1456
          %v1458 = vpop.xlane.xlu0 %1457
          %v1459 = vadd.f32 %v1407, %v1409
          %1460 = vadd.xlane.f32.xlu0 %v1459
          %v1461 = vpop.xlane.xlu0 %1460
          %v1462 = vadd.f32 %v1411, %v1413
          %1463 = vadd.xlane.f32.xlu0 %v1462
          %v1464 = vpop.xlane.xlu0 %1463
          %v1465 = vadd.f32 %v1415, %v1417
          %1466 = vadd.xlane.f32.xlu0 %v1465
          %v1467 = vpop.xlane.xlu0 %1466
          %v1468 = vadd.f32 %v1419, %v1421
          %1469 = vadd.xlane.f32.xlu0 %v1468
          %v1470 = vpop.xlane.xlu0 %1469
          %v1471 = vadd.f32 %v1423, %v1425
          %1472 = vadd.xlane.f32.xlu0 %v1471
          %v1473 = vpop.xlane.xlu0 %1472
          %v1474 = vadd.f32 %v1234, %v1428
          %v1475 = vadd.f32 %v1235, %v1431
          %v1476 = vadd.f32 %v1236, %v1434
          %v1477 = vadd.f32 %v1237, %v1437
          %v1478 = vadd.f32 %v1238, %v1440
          %v1479 = vadd.f32 %v1239, %v1443
          %v1480 = vadd.f32 %v1240, %v1446
          %v1481 = vadd.f32 %v1241, %v1449
          %v1482 = vadd.f32 %v1242, %v1452
          %v1483 = vadd.f32 %v1243, %v1455
          %v1484 = vadd.f32 %v1244, %v1458
          %v1485 = vadd.f32 %v1245, %v1461
          %v1486 = vadd.f32 %v1246, %v1464
          %v1487 = vadd.f32 %v1247, %v1467
          %v1488 = vadd.f32 %v1248, %v1470
          %v1489 = vadd.f32 %v1249, %v1473
          %vm1490 = vcmask 7168
          %1491 = vst.msk [vmem:[#allocation4] sm:$0xff] %vm1490, %v1474
          %1492 = vst.msk [vmem:[#allocation4 + $0x8] sm:$0xff] %vm1490, %v1475
          %1493 = vst.msk [vmem:[#allocation4 + $0x10] sm:$0xff] %vm1490, %v1476
          %1494 = vst.msk [vmem:[#allocation4 + $0x18] sm:$0xff] %vm1490, %v1477
          %1495 = vst.msk [vmem:[#allocation4 + $0x20] sm:$0xff] %vm1490, %v1478
          %1496 = vst.msk [vmem:[#allocation4 + $0x28] sm:$0xff] %vm1490, %v1479
          %1497 = vst.msk [vmem:[#allocation4 + $0x30] sm:$0xff] %vm1490, %v1480
          %1498 = vst.msk [vmem:[#allocation4 + $0x38] sm:$0xff] %vm1490, %v1481
          %1499 = vst.msk [vmem:[#allocation4 + $0x40] sm:$0xff] %vm1490, %v1482
          %1500 = vst.msk [vmem:[#allocation4 + $0x48] sm:$0xff] %vm1490, %v1483
          %1501 = vst.msk [vmem:[#allocation4 + $0x50] sm:$0xff] %vm1490, %v1484
          %1502 = vst.msk [vmem:[#allocation4 + $0x58] sm:$0xff] %vm1490, %v1485
          %1503 = vst.msk [vmem:[#allocation4 + $0x60] sm:$0xff] %vm1490, %v1486
          %1504 = vst.msk [vmem:[#allocation4 + $0x68] sm:$0xff] %vm1490, %v1487
          %1505 = vst.msk [vmem:[#allocation4 + $0x70] sm:$0xff] %vm1490, %v1488
          %1506 = vst.msk [vmem:[#allocation4 + $0x78] sm:$0xff] %vm1490, %v1489
          %1507 = vst.msk [vmem:[#allocation3] sm:$0xff] %vm1490, %v1154
          %1508 = vst.msk [vmem:[#allocation3 + $0x8] sm:$0xff] %vm1490, %v1155
          %1509 = vst.msk [vmem:[#allocation3 + $0x10] sm:$0xff] %vm1490, %v1156
          %1510 = vst.msk [vmem:[#allocation3 + $0x18] sm:$0xff] %vm1490, %v1157
          %1511 = vst.msk [vmem:[#allocation3 + $0x20] sm:$0xff] %vm1490, %v1158
          %1512 = vst.msk [vmem:[#allocation3 + $0x28] sm:$0xff] %vm1490, %v1159
          %1513 = vst.msk [vmem:[#allocation3 + $0x30] sm:$0xff] %vm1490, %v1160
          %1514 = vst.msk [vmem:[#allocation3 + $0x38] sm:$0xff] %vm1490, %v1161
          %1515 = vst.msk [vmem:[#allocation3 + $0x40] sm:$0xff] %vm1490, %v1162
          %1516 = vst.msk [vmem:[#allocation3 + $0x48] sm:$0xff] %vm1490, %v1163
          %1517 = vst.msk [vmem:[#allocation3 + $0x50] sm:$0xff] %vm1490, %v1164
          %1518 = vst.msk [vmem:[#allocation3 + $0x58] sm:$0xff] %vm1490, %v1165
          %1519 = vst.msk [vmem:[#allocation3 + $0x60] sm:$0xff] %vm1490, %v1166
          %1520 = vst.msk [vmem:[#allocation3 + $0x68] sm:$0xff] %vm1490, %v1167
          %1521 = vst.msk [vmem:[#allocation3 + $0x70] sm:$0xff] %vm1490, %v1168
          %1522 = vst.msk [vmem:[#allocation3 + $0x78] sm:$0xff] %vm1490, %v1169
        $region68: #{tpu_custom_call.1} parent=39 // pred_fallthru
          _
        %p1523 = scmp.eq.s32.totalorder %s32, 1
        // Predicated region
        $region69: #{tpu_custom_call.1} parent=39 // pred_check
          %p1524 = pneg %p1523
        $region70: #{tpu_custom_call.1} parent=39 // pred_check_branch
          %1526 = sbr.rel (%p1524) target = $region72
        $region71: #{tpu_custom_call.1} parent=39 // pred_region
          %v1527 = vld [vmem:[#allocation3] sm:$0xff]
          %v1528 = vld [vmem:[#allocation3 + $0x8] sm:$0xff]
          %v1529 = vld [vmem:[#allocation3 + $0x10] sm:$0xff]
          %v1530 = vld [vmem:[#allocation3 + $0x18] sm:$0xff]
          %v1531 = vld [vmem:[#allocation3 + $0x20] sm:$0xff]
          %v1532 = vld [vmem:[#allocation3 + $0x28] sm:$0xff]
          %v1533 = vld [vmem:[#allocation3 + $0x30] sm:$0xff]
          %v1534 = vld [vmem:[#allocation3 + $0x38] sm:$0xff]
          %v1535 = vld [vmem:[#allocation3 + $0x40] sm:$0xff]
          %v1536 = vld [vmem:[#allocation3 + $0x48] sm:$0xff]
          %v1537 = vld [vmem:[#allocation3 + $0x50] sm:$0xff]
          %v1538 = vld [vmem:[#allocation3 + $0x58] sm:$0xff]
          %v1539 = vld [vmem:[#allocation3 + $0x60] sm:$0xff]
          %v1540 = vld [vmem:[#allocation3 + $0x68] sm:$0xff]
          %v1541 = vld [vmem:[#allocation3 + $0x70] sm:$0xff]
          %v1542 = vld [vmem:[#allocation3 + $0x78] sm:$0xff]
          %v1543 = vld [vmem:[#allocation4] sm:$0xff]
          %v1544 = vld [vmem:[#allocation4 + $0x8] sm:$0xff]
          %v1545 = vld [vmem:[#allocation4 + $0x10] sm:$0xff]
          %v1546 = vld [vmem:[#allocation4 + $0x18] sm:$0xff]
          %v1547 = vld [vmem:[#allocation4 + $0x20] sm:$0xff]
          %v1548 = vld [vmem:[#allocation4 + $0x28] sm:$0xff]
          %v1549 = vld [vmem:[#allocation4 + $0x30] sm:$0xff]
          %v1550 = vld [vmem:[#allocation4 + $0x38] sm:$0xff]
          %v1551 = vld [vmem:[#allocation4 + $0x40] sm:$0xff]
          %v1552 = vld [vmem:[#allocation4 + $0x48] sm:$0xff]
          %v1553 = vld [vmem:[#allocation4 + $0x50] sm:$0xff]
          %v1554 = vld [vmem:[#allocation4 + $0x58] sm:$0xff]
          %v1555 = vld [vmem:[#allocation4 + $0x60] sm:$0xff]
          %v1556 = vld [vmem:[#allocation4 + $0x68] sm:$0xff]
          %v1557 = vld [vmem:[#allocation4 + $0x70] sm:$0xff]
          %v1558 = vld [vmem:[#allocation4 + $0x78] sm:$0xff]
          %v1559 = vlog2.pop %v1543
          %v1560 = vmul.f32 %v1559, 0.6931472
          %v1561 = vlog2.pop %v1544
          %v1562 = vmul.f32 %v1561, 0.6931472
          %v1563 = vlog2.pop %v1545
          %v1564 = vmul.f32 %v1563, 0.6931472
          %v1565 = vlog2.pop %v1546
          %v1566 = vmul.f32 %v1565, 0.6931472
          %v1567 = vlog2.pop %v1547
          %v1568 = vmul.f32 %v1567, 0.6931472
          %v1569 = vlog2.pop %v1548
          %v1570 = vmul.f32 %v1569, 0.6931472
          %v1571 = vlog2.pop %v1549
          %v1572 = vmul.f32 %v1571, 0.6931472
          %v1573 = vlog2.pop %v1550
          %v1574 = vmul.f32 %v1573, 0.6931472
          %v1575 = vlog2.pop %v1551
          %v1576 = vmul.f32 %v1575, 0.6931472
          %v1577 = vlog2.pop %v1552
          %v1578 = vmul.f32 %v1577, 0.6931472
          %v1579 = vlog2.pop %v1553
          %v1580 = vmul.f32 %v1579, 0.6931472
          %v1581 = vlog2.pop %v1554
          %v1582 = vmul.f32 %v1581, 0.6931472
          %v1583 = vlog2.pop %v1555
          %v1584 = vmul.f32 %v1583, 0.6931472
          %v1585 = vlog2.pop %v1556
          %v1586 = vmul.f32 %v1585, 0.6931472
          %v1587 = vlog2.pop %v1557
          %v1588 = vmul.f32 %v1587, 0.6931472
          %v1589 = vlog2.pop %v1558
          %v1590 = vmul.f32 %v1589, 0.6931472
          %v1591 = vadd.f32 %v1527, %v1560
          %v1592 = vadd.f32 %v1528, %v1562
          %v1593 = vadd.f32 %v1529, %v1564
          %v1594 = vadd.f32 %v1530, %v1566
          %v1595 = vadd.f32 %v1531, %v1568
          %v1596 = vadd.f32 %v1532, %v1570
          %v1597 = vadd.f32 %v1533, %v1572
          %v1598 = vadd.f32 %v1534, %v1574
          %v1599 = vadd.f32 %v1535, %v1576
          %v1600 = vadd.f32 %v1536, %v1578
          %v1601 = vadd.f32 %v1537, %v1580
          %v1602 = vadd.f32 %v1538, %v1582
          %v1603 = vadd.f32 %v1539, %v1584
          %v1604 = vadd.f32 %v1540, %v1586
          %v1605 = vadd.f32 %v1541, %v1588
          %v1606 = vadd.f32 %v1542, %v1590
          %1608 = vset.pattern.permute.xlu0 0
          %1609 = vperm.xlu0 %1608, %v1591
          %v1610 = vpop.permute.xlu0 %1609
          %1613 = vset.pattern.permute.xlu0 0
          %1614 = vperm.xlu0 %1613, %v1592
          %v1615 = vpop.permute.xlu0 %1614
          %1618 = vset.pattern.permute.xlu0 0
          %1619 = vperm.xlu0 %1618, %v1593
          %v1620 = vpop.permute.xlu0 %1619
          %1623 = vset.pattern.permute.xlu0 0
          %1624 = vperm.xlu0 %1623, %v1594
          %v1625 = vpop.permute.xlu0 %1624
          %1628 = vset.pattern.permute.xlu0 0
          %1629 = vperm.xlu0 %1628, %v1595
          %v1630 = vpop.permute.xlu0 %1629
          %1633 = vset.pattern.permute.xlu0 0
          %1634 = vperm.xlu0 %1633, %v1596
          %v1635 = vpop.permute.xlu0 %1634
          %1638 = vset.pattern.permute.xlu0 0
          %1639 = vperm.xlu0 %1638, %v1597
          %v1640 = vpop.permute.xlu0 %1639
          %1643 = vset.pattern.permute.xlu0 0
          %1644 = vperm.xlu0 %1643, %v1598
          %v1645 = vpop.permute.xlu0 %1644
          %1648 = vset.pattern.permute.xlu0 0
          %1649 = vperm.xlu0 %1648, %v1599
          %v1650 = vpop.permute.xlu0 %1649
          %1653 = vset.pattern.permute.xlu0 0
          %1654 = vperm.xlu0 %1653, %v1600
          %v1655 = vpop.permute.xlu0 %1654
          %1658 = vset.pattern.permute.xlu0 0
          %1659 = vperm.xlu0 %1658, %v1601
          %v1660 = vpop.permute.xlu0 %1659
          %1663 = vset.pattern.permute.xlu0 0
          %1664 = vperm.xlu0 %1663, %v1602
          %v1665 = vpop.permute.xlu0 %1664
          %1668 = vset.pattern.permute.xlu0 0
          %1669 = vperm.xlu0 %1668, %v1603
          %v1670 = vpop.permute.xlu0 %1669
          %1673 = vset.pattern.permute.xlu0 0
          %1674 = vperm.xlu0 %1673, %v1604
          %v1675 = vpop.permute.xlu0 %1674
          %1678 = vset.pattern.permute.xlu0 0
          %1679 = vperm.xlu0 %1678, %v1605
          %v1680 = vpop.permute.xlu0 %1679
          %1683 = vset.pattern.permute.xlu0 0
          %1684 = vperm.xlu0 %1683, %v1606
          %v1685 = vpop.permute.xlu0 %1684
          %v1687 = vsub.f32 %v1009, %v1610
          %v1688 = vsub.f32 %v1011, %v1610
          %v1689 = vsub.f32 %v1013, %v1615
          %v1690 = vsub.f32 %v1015, %v1615
          %v1691 = vsub.f32 %v1019, %v1620
          %v1692 = vsub.f32 %v1021, %v1620
          %v1693 = vsub.f32 %v1023, %v1625
          %v1694 = vsub.f32 %v1025, %v1625
          %v1695 = vsub.f32 %v1029, %v1630
          %v1696 = vsub.f32 %v1031, %v1630
          %v1697 = vsub.f32 %v1033, %v1635
          %v1698 = vsub.f32 %v1035, %v1635
          %v1699 = vsub.f32 %v1039, %v1640
          %v1700 = vsub.f32 %v1041, %v1640
          %v1701 = vsub.f32 %v1043, %v1645
          %v1702 = vsub.f32 %v1045, %v1645
          %v1703 = vsub.f32 %v1049, %v1650
          %v1704 = vsub.f32 %v1051, %v1650
          %v1705 = vsub.f32 %v1053, %v1655
          %v1706 = vsub.f32 %v1055, %v1655
          %v1707 = vsub.f32 %v1059, %v1660
          %v1708 = vsub.f32 %v1061, %v1660
          %v1709 = vsub.f32 %v1063, %v1665
          %v1710 = vsub.f32 %v1065, %v1665
          %v1711 = vsub.f32 %v1069, %v1670
          %v1712 = vsub.f32 %v1071, %v1670
          %v1713 = vsub.f32 %v1073, %v1675
          %v1714 = vsub.f32 %v1075, %v1675
          %v1715 = vsub.f32 %v1079, %v1680
          %v1716 = vsub.f32 %v1081, %v1680
          %v1717 = vsub.f32 %v1083, %v1685
          %v1718 = vsub.f32 %v1085, %v1685
          %1719 = vst [vmem:[%s367] sm:$0xff] %v1687
          %1720 = vst [vmem:[%s367 + $0x8] sm:$0xff] %v1688
          %1721 = vst [vmem:[%s367 + $0x10] sm:$0xff] %v1689
          %1722 = vst [vmem:[%s367 + $0x18] sm:$0xff] %v1690
          %1723 = vst [vmem:[%s367 + $0x20] sm:$0xff] %v1691
          %1724 = vst [vmem:[%s367 + $0x28] sm:$0xff] %v1692
          %1725 = vst [vmem:[%s367 + $0x30] sm:$0xff] %v1693
          %1726 = vst [vmem:[%s367 + $0x38] sm:$0xff] %v1694
          %1727 = vst [vmem:[%s367 + $0x40] sm:$0xff] %v1695
          %1728 = vst [vmem:[%s367 + $0x48] sm:$0xff] %v1696
          %1729 = vst [vmem:[%s367 + $0x50] sm:$0xff] %v1697
          %1730 = vst [vmem:[%s367 + $0x58] sm:$0xff] %v1698
          %1731 = vst [vmem:[%s367 + $0x60] sm:$0xff] %v1699
          %1732 = vst [vmem:[%s367 + $0x68] sm:$0xff] %v1700
          %1733 = vst [vmem:[%s367 + $0x70] sm:$0xff] %v1701
          %1734 = vst [vmem:[%s367 + $0x78] sm:$0xff] %v1702
          %1735 = vst [vmem:[%s367 + $0x80] sm:$0xff] %v1703
          %1736 = vst [vmem:[%s367 + $0x88] sm:$0xff] %v1704
          %1737 = vst [vmem:[%s367 + $0x90] sm:$0xff] %v1705
          %1738 = vst [vmem:[%s367 + $0x98] sm:$0xff] %v1706
          %1739 = vst [vmem:[%s367 + $0xa0] sm:$0xff] %v1707
          %1740 = vst [vmem:[%s367 + $0xa8] sm:$0xff] %v1708
          %1741 = vst [vmem:[%s367 + $0xb0] sm:$0xff] %v1709
          %1742 = vst [vmem:[%s367 + $0xb8] sm:$0xff] %v1710
          %1743 = vst [vmem:[%s367 + $0xc0] sm:$0xff] %v1711
          %1744 = vst [vmem:[%s367 + $0xc8] sm:$0xff] %v1712
          %1745 = vst [vmem:[%s367 + $0xd0] sm:$0xff] %v1713
          %1746 = vst [vmem:[%s367 + $0xd8] sm:$0xff] %v1714
          %1747 = vst [vmem:[%s367 + $0xe0] sm:$0xff] %v1715
          %1748 = vst [vmem:[%s367 + $0xe8] sm:$0xff] %v1716
          %1749 = vst [vmem:[%s367 + $0xf0] sm:$0xff] %v1717
          %1750 = vst [vmem:[%s367 + $0xf8] sm:$0xff] %v1718
        $region72: #{tpu_custom_call.1} parent=39 // pred_fallthru
          _
        %s1751 = sand.u32 %s177, 1
        %s1752 = scalar_lea.sflag [#allocation7], %s1751
        %s1753 = sand.u32 %s177, 1
        %s1754 = smul.addr %s1753, 256
        %s1755 = scalar_lea.vmem [#allocation14], %s1754
        // Predicated region
        $region73: #{tpu_custom_call.1} parent=39 // pred_check
          %p1756 = pneg %p187
        $region74: #{tpu_custom_call.1} parent=39 // pred_check_branch
          %1758 = sbr.rel (%p1756) target = $region76
        $region75: #{tpu_custom_call.1} parent=39 // pred_region
          %s1759 = smul.u32 %s33, %s32
          %s1760 = smul.u32 16, %s31
          %s1761 = smul.u32 2, %s1759
          %s1763 = ssub.s32 4096, 4096
          %1764 = vsyncadd %s1752, %s1763
          %s1765 = smul.addr %s1760, 8
          %s1766 = sadd.s32 %s1761, %s1765
          %s1767 = smul.addr %s1766, 128
          %s1768 = scalar_lea.hbm %s5, %s1767
          %s1769 = sshll.u32 %s1755, 4
          %s1770 = int_to_ptr.vmem [resolvable:$true] %s1769
          %1775 = dma.vmem_to_hbm [thread:$0]  %s1770, 4096, %s1768, %s1752, 256, 1024, 16
        $region76: #{tpu_custom_call.1} parent=39 // pred_fallthru
          _
      $region40: #{tpu_custom_call.1} parent=5 // pred_fallthru
        _
      %p1776 = scmp.le.s32.totalorder 2, %s21
      // Predicated region
      $region77: #{tpu_custom_call.1} parent=5 // pred_check
        %p1777 = pneg %p1776
      $region78: #{tpu_custom_call.1} parent=5 // pred_check_branch
        %1779 = sbr.rel (%p1777) target = $region80
      $region79: #{tpu_custom_call.1} parent=5 // pred_region
        %s1780 = ssub.s32 %s21, 2
        // Predicated region
        $region81: #{tpu_custom_call.1} parent=79 // pred_check
          %p1781 = pneg %p193
        $region82: #{tpu_custom_call.1} parent=79 // pred_check_branch
          %1783 = sbr.rel (%p1781) target = $region84
        $region83: #{tpu_custom_call.1} parent=79 // pred_region
          %s1784 = sand.u32 %s178, 1
          %s1785 = scalar_lea.sflag [#allocation7], %s1784
          %s1786 = sand.u32 %s178, 1
          %s1787 = smul.addr %s1786, 256
          %s1788 = scalar_lea.vmem [#allocation14], %s1787
          %1789 = dma.done %s1785, 4096
        $region84: #{tpu_custom_call.1} parent=79 // pred_fallthru
          _
      $region80: #{tpu_custom_call.1} parent=5 // pred_fallthru
        _
    $region6: #{tpu_custom_call.1} parent=1 // loop_footer
      %s25 = sadd.s32 1, %s21
    $region7: #{tpu_custom_call.1} parent=1 // loop_footer_branch
      %20 = sbr.rel target = $region3
    $region8: #{tpu_custom_call.1} parent=1 // loop_exit
      _
    %1790 = vsyncpa [#allocation6], 1
    %s1791 = scalar_lea.sflag [#allocation6], 1
    %1792 = vsyncpa %s1791, 1
    %1793 = vsyncpa [#allocation9], 1
    %1794 = vsyncpa [#allocation12], 1
    %s1795 = scalar_lea.sflag [#allocation12], 1
    %1796 = vsyncpa %s1795, 1
    %1797 = vsyncpa [#allocation7], 1
    %s1798 = scalar_lea.sflag [#allocation7], 1
    %1799 = vsyncpa %s1798, 1

</llo_original>
